<compile_context>
chip_gen: v7x
topology: tpu7x:2x2x1
jax: 0.10.0
libtpu: 0.0.40
codegen_flags: <defaults>
</compile_context>

<pallas_src>
import functools

import jax
import jax.numpy as jnp
import numpy as np
from jax import lax
from jax.experimental import pallas as pl
from jax.experimental.pallas import tpu as pltpu

BN_EPS = 1e-5


# ------------------------------------------------------------------ BlockSpec helpers
def _const_index_map(ndim):
    return lambda b, _nd=ndim: (0,) * _nd


def _param_spec(arr):
    return pl.BlockSpec(tuple(arr.shape), _const_index_map(arr.ndim))


def pick_batch_tile(n, max_tb=8):
    """Largest divisor of n that is <= max_tb while keeping >= 2 grid steps
    (so the two v7x TensorCores still split the batch)."""
    best = 1
    for t in range(1, min(n, max_tb) + 1):
        if n % t == 0 and (n // t >= 2 or n < 2):
            best = t
    return best


# ------------------------------------------------------------------ fused Pallas kernel
def _encoder_kernel(*refs, residual_flags):
    """Fused CNNEncoder forward for TB images (one grid step).

    refs = (x_ref, [R, A] * num_layers, ep_ref, Wh_ref, out_ref)

    x_ref : (1, TB*H, W*Cin)      batch-major rows (tb*H + h), channels-last lanes
    R     : (3*TB*Ho, TB*Hin)     bf16 0/1 selection, ky-major blocks; folds ky-shift +
                                  H-stride + H zero-padding + the batch tile.  Output
                                  rows are h-major (ho*TB + tb); layer 0's R also folds
                                  the batch-major -> h-major permutation of the input.
    A     : (3, Win*Cin, Wo*Cout) bf16 folded conv weight (kx shift + W stride/pad +
                                  channel contraction + grouped-conv structure)
    ep_ref: (3*nl + 2, maxw)      f32 packed epilogue rows: per layer [scale, shift,
                                  alpha] (tiled along W), then BN1d [hscale, hshift]
    Wh_ref: (Hf, Wf*C, E)         bf16 head weight, pre-permuted to torch's NCHW flatten
    out   : (1, TB, E)
    """
    nl = len(residual_flags)
    x_ref = refs[0]
    ep_ref = refs[1 + 2 * nl]
    wh_ref = refs[2 + 2 * nl]
    out_ref = refs[-1]

    ep = ep_ref[...]                                       # (3*nl+2, maxw) f32
    # (x - 128) / 128 fused into the kernel; zero padding of the *normalized* tensor is
    # folded into R / A (out-of-range taps simply contribute nothing).
    act = (x_ref[0] - 128.0) * (1.0 / 128.0)               # (TB*H, W*Cin) f32

    for l in range(nl):
        r_ref = refs[1 + 2 * l]
        a_ref = refs[2 + 2 * l]
        m0 = r_ref.shape[0] // 3                           # TB * Ho
        n = a_ref.shape[2]                                 # Wo * Cout

        # One bf16 selection matmul for all 3 ky taps (exact: R is 0/1, and its result
        # feeds a bf16 conv matmul anyway).  act itself stays f32 for the epilogue.
        rows = jnp.dot(r_ref[...], act.astype(jnp.bfloat16),
                       preferred_element_type=jnp.float32)  # (3*m0, Win*Cin)
        rows = rows.astype(jnp.bfloat16)

        # Folded im2col conv matmuls (bf16 operands, f32 accumulation).
        acc = jnp.dot(rows[0:m0], a_ref[0], preferred_element_type=jnp.float32)
        acc = acc + jnp.dot(rows[m0:2 * m0], a_ref[1], preferred_element_type=jnp.float32)
        acc = acc + jnp.dot(rows[2 * m0:3 * m0], a_ref[2], preferred_element_type=jnp.float32)

        y = acc * ep[3 * l:3 * l + 1, :n] + ep[3 * l + 1:3 * l + 2, :n]   # BN2d (eval)
        y = jnp.where(y >= 0.0, y, ep[3 * l + 2:3 * l + 3, :n] * y)       # PReLU
        # Dropout3d: identity in eval mode.
        if residual_flags[l]:
            y = y + act
        act = y

    # Flatten + Linear (no bias): activation rows are h-major (h*TB + tb), so each head
    # step is a contiguous (TB, Wf*C) row slice -> Hf batched matmuls with M=TB.
    hf, _, e = wh_ref.shape
    tb = out_ref.shape[1]
    emb = jnp.zeros((tb, e), jnp.float32)
    for hh in range(hf):
        emb = emb + jnp.dot(act[hh * tb:(hh + 1) * tb, :].astype(jnp.bfloat16),
                            wh_ref[hh], preferred_element_type=jnp.float32)
    out_ref[0] = emb * ep[3 * nl:3 * nl + 1, :e] + ep[3 * nl + 1:3 * nl + 2, :e]  # BN1d


# ------------------------------------------------------------------ wrapper
def cnn_encoder_forward(x_nchw, prep):
    n, cin, h, w = x_nchw.shape
    tb = prep["tb"]
    assert n % tb == 0, "batch must be a multiple of the batch tile"
    nsteps = n // tb
    e = prep["emb"]

    # Channels-last row-flattened layout; for cin == 1 this transpose moves no data.
    # TODO(synk): for cin > 1 fold the NCHW->NHWC interleave into the A matrices so the
    #             wrapper never materializes a transposed copy of the input in HBM.
    x = jnp.transpose(x_nchw, (0, 2, 3, 1)).astype(jnp.float32)
    x = x.reshape(nsteps, tb * h, w * cin)

    inputs = [x]
    in_specs = [pl.BlockSpec((1, tb * h, w * cin), lambda b: (b, 0, 0))]
    for layer in prep["layers"]:
        for arr in (layer["R"], layer["A"]):
            inputs.append(arr)
            in_specs.append(_param_spec(arr))
    for arr in (prep["ep"], prep["Wh"]):
        inputs.append(arr)
        in_specs.append(_param_spec(arr))

    kernel = functools.partial(_encoder_kernel, residual_flags=prep["residual_flags"])
    bytes_accessed = int(prep["bytes_params"] + x.size * 4 + n * e * 4)
    out = pl.pallas_call(
        kernel,
        grid=(nsteps,),
        out_shape=jax.ShapeDtypeStruct((nsteps, tb, e), jnp.float32),
        in_specs=in_specs,
        out_specs=pl.BlockSpec((1, tb, e), lambda b: (b, 0, 0)),
        compiler_params=pltpu.CompilerParams(
            dimension_semantics=("parallel",),            # batch steps split across TCs
            vmem_limit_bytes=32 * 1024 * 1024),            # safe on v5e/v6e/v7x budgets
        cost_estimate=pl.CostEstimate(
            flops=int(nsteps * prep["flops_per_step"]),
            transcendentals=0,
            bytes_accessed=bytes_accessed),
    )(*inputs)
    return out.reshape(n, e)


# ------------------------------------------------------------------ parameter prep
def _expand_grouped(w_raw, in_c, groups):
    """Expand grouped conv weight (out_c, in_c//g, 3, 3) to dense (out_c, in_c, 3, 3)."""
    out_c, in_per_g, kh, kw = w_raw.shape
    wn = np.asarray(w_raw, np.float32)
    if groups == 1:
        return wn
    out_per_g = out_c // groups
    dense = np.zeros((out_c, in_c, kh, kw), np.float32)
    for g in range(groups):
        dense[g * out_per_g:(g + 1) * out_per_g,
              g * in_per_g:(g + 1) * in_per_g] = wn[g * out_per_g:(g + 1) * out_per_g]
    return dense


def prepare_encoder(params, cfg, tb):
    """One-time prep (hoisted out of the forward path): fold BN (eval), expand grouped
    convs, build the batch-tiled per-layer R / A matrices, pack the epilogue vectors into
    one array, and permute the head weight for the NCHW flatten."""
    specs = []
    for i in range(1, cfg["num_blocks"] + 1):
        if cfg["reduce_size"] or i == 1:
            specs.append((params[f"convblock{i}"], 2, False))
        specs.append((params[f"convblock{i}residual"], 1, True))

    layers = []
    residual_flags = []
    ep_rows = []
    h, w = cfg["xsize"], cfg["ysize"]
    c = cfg["input_channels"]
    flops_step = 0
    for li, (p, stride, residual) in enumerate(specs):
        w_raw = np.asarray(p["w_raw"], np.float32)
        out_c = w_raw.shape[0]
        in_c = c
        wd = _expand_grouped(w_raw, in_c, p["groups"])        # (out_c, in_c, 3, 3)
        ho = (h + 2 - 3) // stride + 1
        wo = (w + 2 - 3) // stride + 1
        if residual:
            assert stride == 1 and in_c == out_c and ho == h and wo == w
            assert li > 0, "residual layer cannot be the first layer (row-order folding)"

        # Selection matrix: ky-shift + H-stride + H zero-padding + the TB batch tile.
        # Output rows are h-major (ho*TB + tb); layer 0's input is batch-major
        # (tb*H + hin) so its R also performs that permutation for free.
        in_batch_major = (li == 0)
        R = np.zeros((3, tb * ho, tb * h), np.float32)
        for ky in range(3):
            for oi in range(ho):
                r = stride * oi + ky - 1
                if 0 <= r < h:
                    for b in range(tb):
                        in_r = b * h + r if in_batch_major else r * tb + b
                        R[ky, oi * tb + b, in_r] = 1.0
        R_all = R.reshape(3 * tb * ho, tb * h)                # ky-major row blocks

        # Folded im2col conv weight:
        # A[ky, iw*in_c + ci, ov*out_c + co] = sum_kx [iw == stride*ov + kx - 1] * W[co,ci,ky,kx]
        A = np.zeros((3, w * in_c, wo * out_c), np.float32)
        for ky in range(3):
            for kx in range(3):
                for ov in range(wo):
                    iw = stride * ov + kx - 1
                    if 0 <= iw < w:
                        A[ky, iw * in_c:(iw + 1) * in_c,
                          ov * out_c:(ov + 1) * out_c] += wd[:, :, ky, kx].T

        scale = np.asarray(p["gamma"]) / np.sqrt(np.asarray(p["var"]) + BN_EPS)
        shift = np.asarray(p["beta"]) - np.asarray(p["mean"]) * scale
        alpha = np.asarray(p["alpha"])
        ep_rows.append(np.stack([np.tile(scale, wo), np.tile(shift, wo),
                                 np.tile(alpha, wo)]).astype(np.float32))

        layers.append({"R": jnp.asarray(R_all, jnp.bfloat16),
                       "A": jnp.asarray(A, jnp.bfloat16)})
        residual_flags.append(residual)
        flops_step += 2 * (3 * tb * ho) * (tb * h) * (w * in_c)       # selection matmul
        flops_step += 2 * 3 * (tb * ho) * (w * in_c) * (wo * out_c)   # conv matmuls
        h, w, c = ho, wo, out_c

    hp = params["head"]
    emb_dim, feat = np.asarray(hp["w"]).shape
    assert feat == h * w * c
    # Permute head weight so NHWC row-flattened features match torch's NCHW flatten.
    wl = np.asarray(hp["w"], np.float32).reshape(emb_dim, c, h, w)
    wh = wl.transpose(2, 3, 1, 0).reshape(h, w * c, emb_dim)          # [hh][ww*C + cc, e]
    hscale = np.asarray(hp["gamma"]) / np.sqrt(np.asarray(hp["var"]) + BN_EPS)
    hshift = np.asarray(hp["beta"]) - np.asarray(hp["mean"]) * hscale
    flops_step += 2 * tb * feat * emb_dim

    # Pack every per-channel epilogue vector into ONE f32 array (single DMA descriptor
    # instead of 3 per layer + 2 for the head).
    nl = len(layers)
    maxw = max([r.shape[1] for r in ep_rows] + [int(emb_dim)])
    ep = np.zeros((3 * nl + 2, maxw), np.float32)
    for l, r in enumerate(ep_rows):
        ep[3 * l:3 * l + 3, :r.shape[1]] = r
    ep[3 * nl, :emb_dim] = hscale
    ep[3 * nl + 1, :emb_dim] = hshift

    prep = {
        "tb": tb,
        "emb": int(emb_dim),
        "layers": layers,
        "residual_flags": tuple(residual_flags),
        "ep": jnp.asarray(ep, jnp.float32),
        "Wh": jnp.asarray(wh, jnp.bfloat16),
        "flops_per_step": int(flops_step),
    }
    param_arrays = [a for l in layers for a in (l["R"], l["A"])] + [prep["ep"], prep["Wh"]]
    prep["bytes_params"] = int(sum(a.size * a.dtype.itemsize for a in param_arrays))
    return prep


# ------------------------------------------------------------------ parameter init
def make_conv_block_params(key, in_c, out_c, groups):
    k1, k2, k3, k4, k5 = jax.random.split(key, 5)
    w = jax.random.normal(k1, (out_c, in_c // groups, 3, 3), jnp.float32) * 0.1
    gamma = jax.random.uniform(k2, (out_c,), jnp.float32, 0.8, 1.2)
    beta = jax.random.normal(k3, (out_c,), jnp.float32) * 0.1
    mean = jax.random.normal(k4, (out_c,), jnp.float32) * 0.1
    var = jax.random.uniform(k5, (out_c,), jnp.float32, 0.5, 1.5)
    alpha = jnp.full((out_c,), 0.25, jnp.float32)             # nn.PReLU default init
    return {"w_raw": w, "groups": groups, "gamma": gamma, "beta": beta,
            "mean": mean, "var": var, "alpha": alpha}


def make_head_params(key, feat, emb):
    k1, k2, k3, k4, k5 = jax.random.split(key, 5)
    w = jax.random.normal(k1, (emb, feat), jnp.float32) / jnp.sqrt(float(feat))
    gamma = jax.random.uniform(k2, (emb,), jnp.float32, 0.8, 1.2)
    beta = jax.random.normal(k3, (emb,), jnp.float32) * 0.1
    mean = jax.random.normal(k4, (emb,), jnp.float32) * 0.1
    var = jax.random.uniform(k5, (emb,), jnp.float32, 0.5, 1.5)
    return {"w": w, "gamma": gamma, "beta": beta, "mean": mean, "var": var}


# ------------------------------------------------------------------ pure-JAX reference
def _ref_conv_block(x, p, stride, residual):
    y = lax.conv_general_dilated(
        x, p["w_raw"], window_strides=(stride, stride), padding=((1, 1), (1, 1)),
        dimension_numbers=("NCHW", "OIHW", "NCHW"), feature_group_count=p["groups"],
        precision=lax.Precision.HIGHEST)
    y = (y - p["mean"][None, :, None, None]) / jnp.sqrt(p["var"][None, :, None, None] + BN_EPS)
    y = y * p["gamma"][None, :, None, None] + p["beta"][None, :, None, None]
    y = jnp.where(y >= 0, y, p["alpha"][None, :, None, None] * y)
    if residual:
        y = y + x
    return y


def cnn_encoder_reference(x, params, *, num_blocks, reduce_size):
    out = (x - 128.0) / 128.0
    for i in range(1, num_blocks + 1):
        if reduce_size or i == 1:
            out = _ref_conv_block(out, params[f"convblock{i}"], 2, False)
        out = _ref_conv_block(out, params[f"convblock{i}residual"], 1, True)
    flat = out.reshape(out.shape[0], -1)
    hp = params["head"]
    y = jnp.dot(flat, hp["w"].T, precision=lax.Precision.HIGHEST)
    y = (y - hp["mean"]) / jnp.sqrt(hp["var"] + BN_EPS)
    return y * hp["gamma"] + hp["beta"]


# ------------------------------------------------------------------ main
if __name__ == "__main__":
    cfg = dict(xsize=16, ysize=16, num_blocks=2, channels=8, input_channels=1,
               reduce_size=True, dropout=0.2, embedding_size=32,
               vocab=[str(i) for i in range(10)])
    batch = 8

    key = jax.random.PRNGKey(0)
    kx, *pkeys = jax.random.split(key, 8)
    x = jax.random.uniform(kx, (batch, cfg["input_channels"], cfg["xsize"], cfg["ysize"]),
                           jnp.float32, 0.0, 255.0)

    params = {}
    tmp_x, tmp_y = cfg["xsize"], cfg["ysize"]
    ki = 0
    for i in range(1, cfg["num_blocks"] + 1):
        if cfg["reduce_size"] or i == 1:
            in_c = cfg["input_channels"] if i == 1 else cfg["channels"]
            params[f"convblock{i}"] = make_conv_block_params(pkeys[ki], in_c, cfg["channels"], 1)
            ki += 1
            tmp_x //= 2
            tmp_y //= 2
        params[f"convblock{i}residual"] = make_conv_block_params(
            pkeys[ki], cfg["channels"], cfg["channels"], cfg["channels"] // 2)
        ki += 1
    params["head"] = make_head_params(pkeys[ki], tmp_x * tmp_y * cfg["channels"],
                                      cfg["embedding_size"])

    tb = pick_batch_tile(batch)                               # -> 4: grid of 2 parallel steps
    prep = prepare_encoder(params, cfg, tb)                   # one-time parameter prep
    out = cnn_encoder_forward(x, prep)
    out = jax.block_until_ready(out)
    assert out.shape == (batch, cfg["embedding_size"])

    ref = jax.block_until_ready(
        cnn_encoder_reference(x, params, num_blocks=cfg["num_blocks"],
                              reduce_size=cfg["reduce_size"]))
    # bf16 MXU operands (f32 accumulation, f32 BN/PReLU epilogue) -> slightly looser tol.
    np.testing.assert_allclose(np.asarray(out), np.asarray(ref), rtol=3e-2, atol=3e-2)
    print("KERNEL_OK")
</pallas_src>

<mosaic_0001>
module attributes {stable_mosaic.version = 11 : i64} {
  func.func @_encoder_kernel(%arg0: i32, %arg1: memref<1x64x16xf32, #tpu.memory_space<vmem>>, %arg2: memref<96x64xbf16, #tpu.memory_space<vmem>>, %arg3: memref<3x16x64xbf16, #tpu.memory_space<vmem>>, %arg4: memref<96x32xbf16, #tpu.memory_space<vmem>>, %arg5: memref<3x64x64xbf16, #tpu.memory_space<vmem>>, %arg6: memref<48x32xbf16, #tpu.memory_space<vmem>>, %arg7: memref<3x64x32xbf16, #tpu.memory_space<vmem>>, %arg8: memref<48x16xbf16, #tpu.memory_space<vmem>>, %arg9: memref<3x32x32xbf16, #tpu.memory_space<vmem>>, %arg10: memref<14x64xf32, #tpu.memory_space<vmem>>, %arg11: memref<4x32x32xbf16, #tpu.memory_space<vmem>>, %arg12: memref<1x4x32xf32, #tpu.memory_space<vmem>>) attributes {dimension_semantics = [#tpu.dimension_semantics<parallel>], iteration_bounds = array<i64: 2>, scalar_prefetch = 0 : i64, scratch_operands = 0 : i64, tpu.core_type = #tpu.core_type<tc>, window_params = [{transform_indices = @transform_0, window_bounds = array<i64: 1, 64, 16>}, {pipeline_mode = #tpu.pipeline_mode<synchronous>, transform_indices = @transform_1, window_bounds = array<i64: 96, 64>}, {pipeline_mode = #tpu.pipeline_mode<synchronous>, transform_indices = @transform_2, window_bounds = array<i64: 3, 16, 64>}, {pipeline_mode = #tpu.pipeline_mode<synchronous>, transform_indices = @transform_3, window_bounds = array<i64: 96, 32>}, {pipeline_mode = #tpu.pipeline_mode<synchronous>, transform_indices = @transform_4, window_bounds = array<i64: 3, 64, 64>}, {pipeline_mode = #tpu.pipeline_mode<synchronous>, transform_indices = @transform_5, window_bounds = array<i64: 48, 32>}, {pipeline_mode = #tpu.pipeline_mode<synchronous>, transform_indices = @transform_6, window_bounds = array<i64: 3, 64, 32>}, {pipeline_mode = #tpu.pipeline_mode<synchronous>, transform_indices = @transform_7, window_bounds = array<i64: 48, 16>}, {pipeline_mode = #tpu.pipeline_mode<synchronous>, transform_indices = @transform_8, window_bounds = array<i64: 3, 32, 32>}, {pipeline_mode = #tpu.pipeline_mode<synchronous>, transform_indices = @transform_9, window_bounds = array<i64: 14, 64>}, {pipeline_mode = #tpu.pipeline_mode<synchronous>, transform_indices = @transform_10, window_bounds = array<i64: 4, 32, 32>}, {transform_indices = @transform_11, window_bounds = array<i64: 1, 4, 32>}]} {
    %c0 = arith.constant 0 : index
    %c0_0 = arith.constant 0 : index
    %0 = vector.load %arg10[%c0, %c0_0] : memref<14x64xf32, #tpu.memory_space<vmem>>, vector<14x64xf32>
    %c0_1 = arith.constant 0 : index
    %c0_2 = arith.constant 0 : index
    %c0_3 = arith.constant 0 : index
    %1 = vector.load %arg1[%c0_1, %c0_2, %c0_3] : memref<1x64x16xf32, #tpu.memory_space<vmem>>, vector<1x64x16xf32>
    %2 = vector.shape_cast %1 : vector<1x64x16xf32> to vector<64x16xf32>
    %cst = arith.constant 1.280000e+02 : f32
    %3 = vector.broadcast %cst : f32 to vector<64x16xf32>
    %4 = arith.subf %2, %3 : vector<64x16xf32>
    %cst_4 = arith.constant 7.812500e-03 : f32
    %5 = vector.broadcast %cst_4 : f32 to vector<64x16xf32>
    %6 = arith.mulf %4, %5 : vector<64x16xf32>
    %c0_5 = arith.constant 0 : index
    %c0_6 = arith.constant 0 : index
    %7 = vector.load %arg2[%c0_5, %c0_6] : memref<96x64xbf16, #tpu.memory_space<vmem>>, vector<96x64xbf16>
    %8 = arith.truncf %6 : vector<64x16xf32> to vector<64x16xbf16>
    %cst_7 = arith.constant dense<0.000000e+00> : vector<96x16xf32>
    %9 = tpu.matmul %7, %8, %cst_7 {dimension_numbers = #tpu.dot_dimension_numbers<[1], [0], [0], [1], [0, 0, 1, 1], [], []>} : vector<96x64xbf16>, vector<64x16xbf16>, vector<96x16xf32> -> vector<96x16xf32>
    %10 = arith.truncf %9 : vector<96x16xf32> to vector<96x16xbf16>
    %11 = vector.extract_strided_slice %10 {offsets = [0, 0], sizes = [32, 16], strides = [1, 1]} : vector<96x16xbf16> to vector<32x16xbf16>
    %c0_8 = arith.constant 0 : index
    %c0_9 = arith.constant 0 : index
    %c0_10 = arith.constant 0 : index
    %12 = vector.load %arg3[%c0_8, %c0_9, %c0_10] : memref<3x16x64xbf16, #tpu.memory_space<vmem>>, vector<1x16x64xbf16>
    %13 = vector.shape_cast %12 : vector<1x16x64xbf16> to vector<16x64xbf16>
    %cst_11 = arith.constant dense<0.000000e+00> : vector<32x64xf32>
    %14 = tpu.matmul %11, %13, %cst_11 {dimension_numbers = #tpu.dot_dimension_numbers<[1], [0], [0], [1], [0, 0, 1, 1], [], []>} : vector<32x16xbf16>, vector<16x64xbf16>, vector<32x64xf32> -> vector<32x64xf32>
    %15 = vector.extract_strided_slice %10 {offsets = [32, 0], sizes = [32, 16], strides = [1, 1]} : vector<96x16xbf16> to vector<32x16xbf16>
    %c1 = arith.constant 1 : index
    %c0_12 = arith.constant 0 : index
    %c0_13 = arith.constant 0 : index
    %16 = vector.load %arg3[%c1, %c0_12, %c0_13] : memref<3x16x64xbf16, #tpu.memory_space<vmem>>, vector<1x16x64xbf16>
    %17 = vector.shape_cast %16 : vector<1x16x64xbf16> to vector<16x64xbf16>
    %cst_14 = arith.constant dense<0.000000e+00> : vector<32x64xf32>
    %18 = tpu.matmul %15, %17, %cst_14 {dimension_numbers = #tpu.dot_dimension_numbers<[1], [0], [0], [1], [0, 0, 1, 1], [], []>} : vector<32x16xbf16>, vector<16x64xbf16>, vector<32x64xf32> -> vector<32x64xf32>
    %19 = arith.addf %14, %18 : vector<32x64xf32>
    %20 = vector.extract_strided_slice %10 {offsets = [64, 0], sizes = [32, 16], strides = [1, 1]} : vector<96x16xbf16> to vector<32x16xbf16>
    %c2 = arith.constant 2 : index
    %c0_15 = arith.constant 0 : index
    %c0_16 = arith.constant 0 : index
    %21 = vector.load %arg3[%c2, %c0_15, %c0_16] : memref<3x16x64xbf16, #tpu.memory_space<vmem>>, vector<1x16x64xbf16>
    %22 = vector.shape_cast %21 : vector<1x16x64xbf16> to vector<16x64xbf16>
    %cst_17 = arith.constant dense<0.000000e+00> : vector<32x64xf32>
    %23 = tpu.matmul %20, %22, %cst_17 {dimension_numbers = #tpu.dot_dimension_numbers<[1], [0], [0], [1], [0, 0, 1, 1], [], []>} : vector<32x16xbf16>, vector<16x64xbf16>, vector<32x64xf32> -> vector<32x64xf32>
    %24 = arith.addf %19, %23 : vector<32x64xf32>
    %25 = vector.extract_strided_slice %0 {offsets = [0, 0], sizes = [1, 64], strides = [1, 1]} : vector<14x64xf32> to vector<1x64xf32>
    %26 = vector.broadcast %25 : vector<1x64xf32> to vector<32x64xf32>
    %27 = arith.mulf %24, %26 : vector<32x64xf32>
    %28 = vector.extract_strided_slice %0 {offsets = [1, 0], sizes = [1, 64], strides = [1, 1]} : vector<14x64xf32> to vector<1x64xf32>
    %29 = vector.broadcast %28 : vector<1x64xf32> to vector<32x64xf32>
    %30 = arith.addf %27, %29 : vector<32x64xf32>
    %cst_18 = arith.constant 0.000000e+00 : f32
    %31 = vector.broadcast %cst_18 : f32 to vector<32x64xf32>
    %32 = arith.cmpf oge, %30, %31 : vector<32x64xf32>
    %33 = vector.extract_strided_slice %0 {offsets = [2, 0], sizes = [1, 64], strides = [1, 1]} : vector<14x64xf32> to vector<1x64xf32>
    %34 = vector.broadcast %33 : vector<1x64xf32> to vector<32x64xf32>
    %35 = arith.mulf %34, %30 : vector<32x64xf32>
    %36 = arith.select %32, %30, %35 : vector<32x64xi1>, vector<32x64xf32>
    %c0_19 = arith.constant 0 : index
    %c0_20 = arith.constant 0 : index
    %37 = vector.load %arg4[%c0_19, %c0_20] : memref<96x32xbf16, #tpu.memory_space<vmem>>, vector<96x32xbf16>
    %38 = arith.truncf %36 : vector<32x64xf32> to vector<32x64xbf16>
    %cst_21 = arith.constant dense<0.000000e+00> : vector<96x64xf32>
    %39 = tpu.matmul %37, %38, %cst_21 {dimension_numbers = #tpu.dot_dimension_numbers<[1], [0], [0], [1], [0, 0, 1, 1], [], []>} : vector<96x32xbf16>, vector<32x64xbf16>, vector<96x64xf32> -> vector<96x64xf32>
    %40 = arith.truncf %39 : vector<96x64xf32> to vector<96x64xbf16>
    %41 = vector.extract_strided_slice %40 {offsets = [0, 0], sizes = [32, 64], strides = [1, 1]} : vector<96x64xbf16> to vector<32x64xbf16>
    %c0_22 = arith.constant 0 : index
    %c0_23 = arith.constant 0 : index
    %c0_24 = arith.constant 0 : index
    %42 = vector.load %arg5[%c0_22, %c0_23, %c0_24] : memref<3x64x64xbf16, #tpu.memory_space<vmem>>, vector<1x64x64xbf16>
    %43 = vector.shape_cast %42 : vector<1x64x64xbf16> to vector<64x64xbf16>
    %cst_25 = arith.constant dense<0.000000e+00> : vector<32x64xf32>
    %44 = tpu.matmul %41, %43, %cst_25 {dimension_numbers = #tpu.dot_dimension_numbers<[1], [0], [0], [1], [0, 0, 1, 1], [], []>} : vector<32x64xbf16>, vector<64x64xbf16>, vector<32x64xf32> -> vector<32x64xf32>
    %45 = vector.extract_strided_slice %40 {offsets = [32, 0], sizes = [32, 64], strides = [1, 1]} : vector<96x64xbf16> to vector<32x64xbf16>
    %c1_26 = arith.constant 1 : index
    %c0_27 = arith.constant 0 : index
    %c0_28 = arith.constant 0 : index
    %46 = vector.load %arg5[%c1_26, %c0_27, %c0_28] : memref<3x64x64xbf16, #tpu.memory_space<vmem>>, vector<1x64x64xbf16>
    %47 = vector.shape_cast %46 : vector<1x64x64xbf16> to vector<64x64xbf16>
    %cst_29 = arith.constant dense<0.000000e+00> : vector<32x64xf32>
    %48 = tpu.matmul %45, %47, %cst_29 {dimension_numbers = #tpu.dot_dimension_numbers<[1], [0], [0], [1], [0, 0, 1, 1], [], []>} : vector<32x64xbf16>, vector<64x64xbf16>, vector<32x64xf32> -> vector<32x64xf32>
    %49 = arith.addf %44, %48 : vector<32x64xf32>
    %50 = vector.extract_strided_slice %40 {offsets = [64, 0], sizes = [32, 64], strides = [1, 1]} : vector<96x64xbf16> to vector<32x64xbf16>
    %c2_30 = arith.constant 2 : index
    %c0_31 = arith.constant 0 : index
    %c0_32 = arith.constant 0 : index
    %51 = vector.load %arg5[%c2_30, %c0_31, %c0_32] : memref<3x64x64xbf16, #tpu.memory_space<vmem>>, vector<1x64x64xbf16>
    %52 = vector.shape_cast %51 : vector<1x64x64xbf16> to vector<64x64xbf16>
    %cst_33 = arith.constant dense<0.000000e+00> : vector<32x64xf32>
    %53 = tpu.matmul %50, %52, %cst_33 {dimension_numbers = #tpu.dot_dimension_numbers<[1], [0], [0], [1], [0, 0, 1, 1], [], []>} : vector<32x64xbf16>, vector<64x64xbf16>, vector<32x64xf32> -> vector<32x64xf32>
    %54 = arith.addf %49, %53 : vector<32x64xf32>
    %55 = vector.extract_strided_slice %0 {offsets = [3, 0], sizes = [1, 64], strides = [1, 1]} : vector<14x64xf32> to vector<1x64xf32>
    %56 = vector.broadcast %55 : vector<1x64xf32> to vector<32x64xf32>
    %57 = arith.mulf %54, %56 : vector<32x64xf32>
    %58 = vector.extract_strided_slice %0 {offsets = [4, 0], sizes = [1, 64], strides = [1, 1]} : vector<14x64xf32> to vector<1x64xf32>
    %59 = vector.broadcast %58 : vector<1x64xf32> to vector<32x64xf32>
    %60 = arith.addf %57, %59 : vector<32x64xf32>
    %cst_34 = arith.constant 0.000000e+00 : f32
    %61 = vector.broadcast %cst_34 : f32 to vector<32x64xf32>
    %62 = arith.cmpf oge, %60, %61 : vector<32x64xf32>
    %63 = vector.extract_strided_slice %0 {offsets = [5, 0], sizes = [1, 64], strides = [1, 1]} : vector<14x64xf32> to vector<1x64xf32>
    %64 = vector.broadcast %63 : vector<1x64xf32> to vector<32x64xf32>
    %65 = arith.mulf %64, %60 : vector<32x64xf32>
    %66 = arith.select %62, %60, %65 : vector<32x64xi1>, vector<32x64xf32>
    %67 = arith.addf %66, %36 : vector<32x64xf32>
    %c0_35 = arith.constant 0 : index
    %c0_36 = arith.constant 0 : index
    %68 = vector.load %arg6[%c0_35, %c0_36] : memref<48x32xbf16, #tpu.memory_space<vmem>>, vector<48x32xbf16>
    %69 = arith.truncf %67 : vector<32x64xf32> to vector<32x64xbf16>
    %cst_37 = arith.constant dense<0.000000e+00> : vector<48x64xf32>
    %70 = tpu.matmul %68, %69, %cst_37 {dimension_numbers = #tpu.dot_dimension_numbers<[1], [0], [0], [1], [0, 0, 1, 1], [], []>} : vector<48x32xbf16>, vector<32x64xbf16>, vector<48x64xf32> -> vector<48x64xf32>
    %71 = arith.truncf %70 : vector<48x64xf32> to vector<48x64xbf16>
    %72 = vector.extract_strided_slice %71 {offsets = [0, 0], sizes = [16, 64], strides = [1, 1]} : vector<48x64xbf16> to vector<16x64xbf16>
    %c0_38 = arith.constant 0 : index
    %c0_39 = arith.constant 0 : index
    %c0_40 = arith.constant 0 : index
    %73 = vector.load %arg7[%c0_38, %c0_39, %c0_40] : memref<3x64x32xbf16, #tpu.memory_space<vmem>>, vector<1x64x32xbf16>
    %74 = vector.shape_cast %73 : vector<1x64x32xbf16> to vector<64x32xbf16>
    %cst_41 = arith.constant dense<0.000000e+00> : vector<16x32xf32>
    %75 = tpu.matmul %72, %74, %cst_41 {dimension_numbers = #tpu.dot_dimension_numbers<[1], [0], [0], [1], [0, 0, 1, 1], [], []>} : vector<16x64xbf16>, vector<64x32xbf16>, vector<16x32xf32> -> vector<16x32xf32>
    %76 = vector.extract_strided_slice %71 {offsets = [16, 0], sizes = [16, 64], strides = [1, 1]} : vector<48x64xbf16> to vector<16x64xbf16>
    %c1_42 = arith.constant 1 : index
    %c0_43 = arith.constant 0 : index
    %c0_44 = arith.constant 0 : index
    %77 = vector.load %arg7[%c1_42, %c0_43, %c0_44] : memref<3x64x32xbf16, #tpu.memory_space<vmem>>, vector<1x64x32xbf16>
    %78 = vector.shape_cast %77 : vector<1x64x32xbf16> to vector<64x32xbf16>
    %cst_45 = arith.constant dense<0.000000e+00> : vector<16x32xf32>
    %79 = tpu.matmul %76, %78, %cst_45 {dimension_numbers = #tpu.dot_dimension_numbers<[1], [0], [0], [1], [0, 0, 1, 1], [], []>} : vector<16x64xbf16>, vector<64x32xbf16>, vector<16x32xf32> -> vector<16x32xf32>
    %80 = arith.addf %75, %79 : vector<16x32xf32>
    %81 = vector.extract_strided_slice %71 {offsets = [32, 0], sizes = [16, 64], strides = [1, 1]} : vector<48x64xbf16> to vector<16x64xbf16>
    %c2_46 = arith.constant 2 : index
    %c0_47 = arith.constant 0 : index
    %c0_48 = arith.constant 0 : index
    %82 = vector.load %arg7[%c2_46, %c0_47, %c0_48] : memref<3x64x32xbf16, #tpu.memory_space<vmem>>, vector<1x64x32xbf16>
    %83 = vector.shape_cast %82 : vector<1x64x32xbf16> to vector<64x32xbf16>
    %cst_49 = arith.constant dense<0.000000e+00> : vector<16x32xf32>
    %84 = tpu.matmul %81, %83, %cst_49 {dimension_numbers = #tpu.dot_dimension_numbers<[1], [0], [0], [1], [0, 0, 1, 1], [], []>} : vector<16x64xbf16>, vector<64x32xbf16>, vector<16x32xf32> -> vector<16x32xf32>
    %85 = arith.addf %80, %84 : vector<16x32xf32>
    %86 = vector.extract_strided_slice %0 {offsets = [6, 0], sizes = [1, 32], strides = [1, 1]} : vector<14x64xf32> to vector<1x32xf32>
    %87 = vector.broadcast %86 : vector<1x32xf32> to vector<16x32xf32>
    %88 = arith.mulf %85, %87 : vector<16x32xf32>
    %89 = vector.extract_strided_slice %0 {offsets = [7, 0], sizes = [1, 32], strides = [1, 1]} : vector<14x64xf32> to vector<1x32xf32>
    %90 = vector.broadcast %89 : vector<1x32xf32> to vector<16x32xf32>
    %91 = arith.addf %88, %90 : vector<16x32xf32>
    %cst_50 = arith.constant 0.000000e+00 : f32
    %92 = vector.broadcast %cst_50 : f32 to vector<16x32xf32>
    %93 = arith.cmpf oge, %91, %92 : vector<16x32xf32>
    %94 = vector.extract_strided_slice %0 {offsets = [8, 0], sizes = [1, 32], strides = [1, 1]} : vector<14x64xf32> to vector<1x32xf32>
    %95 = vector.broadcast %94 : vector<1x32xf32> to vector<16x32xf32>
    %96 = arith.mulf %95, %91 : vector<16x32xf32>
    %97 = arith.select %93, %91, %96 : vector<16x32xi1>, vector<16x32xf32>
    %c0_51 = arith.constant 0 : index
    %c0_52 = arith.constant 0 : index
    %98 = vector.load %arg8[%c0_51, %c0_52] : memref<48x16xbf16, #tpu.memory_space<vmem>>, vector<48x16xbf16>
    %99 = arith.truncf %97 : vector<16x32xf32> to vector<16x32xbf16>
    %cst_53 = arith.constant dense<0.000000e+00> : vector<48x32xf32>
    %100 = tpu.matmul %98, %99, %cst_53 {dimension_numbers = #tpu.dot_dimension_numbers<[1], [0], [0], [1], [0, 0, 1, 1], [], []>} : vector<48x16xbf16>, vector<16x32xbf16>, vector<48x32xf32> -> vector<48x32xf32>
    %101 = arith.truncf %100 : vector<48x32xf32> to vector<48x32xbf16>
    %102 = vector.extract_strided_slice %101 {offsets = [0, 0], sizes = [16, 32], strides = [1, 1]} : vector<48x32xbf16> to vector<16x32xbf16>
    %c0_54 = arith.constant 0 : index
    %c0_55 = arith.constant 0 : index
    %c0_56 = arith.constant 0 : index
    %103 = vector.load %arg9[%c0_54, %c0_55, %c0_56] : memref<3x32x32xbf16, #tpu.memory_space<vmem>>, vector<1x32x32xbf16>
    %104 = vector.shape_cast %103 : vector<1x32x32xbf16> to vector<32x32xbf16>
    %cst_57 = arith.constant dense<0.000000e+00> : vector<16x32xf32>
    %105 = tpu.matmul %102, %104, %cst_57 {dimension_numbers = #tpu.dot_dimension_numbers<[1], [0], [0], [1], [0, 0, 1, 1], [], []>} : vector<16x32xbf16>, vector<32x32xbf16>, vector<16x32xf32> -> vector<16x32xf32>
    %106 = vector.extract_strided_slice %101 {offsets = [16, 0], sizes = [16, 32], strides = [1, 1]} : vector<48x32xbf16> to vector<16x32xbf16>
    %c1_58 = arith.constant 1 : index
    %c0_59 = arith.constant 0 : index
    %c0_60 = arith.constant 0 : index
    %107 = vector.load %arg9[%c1_58, %c0_59, %c0_60] : memref<3x32x32xbf16, #tpu.memory_space<vmem>>, vector<1x32x32xbf16>
    %108 = vector.shape_cast %107 : vector<1x32x32xbf16> to vector<32x32xbf16>
    %cst_61 = arith.constant dense<0.000000e+00> : vector<16x32xf32>
    %109 = tpu.matmul %106, %108, %cst_61 {dimension_numbers = #tpu.dot_dimension_numbers<[1], [0], [0], [1], [0, 0, 1, 1], [], []>} : vector<16x32xbf16>, vector<32x32xbf16>, vector<16x32xf32> -> vector<16x32xf32>
    %110 = arith.addf %105, %109 : vector<16x32xf32>
    %111 = vector.extract_strided_slice %101 {offsets = [32, 0], sizes = [16, 32], strides = [1, 1]} : vector<48x32xbf16> to vector<16x32xbf16>
    %c2_62 = arith.constant 2 : index
    %c0_63 = arith.constant 0 : index
    %c0_64 = arith.constant 0 : index
    %112 = vector.load %arg9[%c2_62, %c0_63, %c0_64] : memref<3x32x32xbf16, #tpu.memory_space<vmem>>, vector<1x32x32xbf16>
    %113 = vector.shape_cast %112 : vector<1x32x32xbf16> to vector<32x32xbf16>
    %cst_65 = arith.constant dense<0.000000e+00> : vector<16x32xf32>
    %114 = tpu.matmul %111, %113, %cst_65 {dimension_numbers = #tpu.dot_dimension_numbers<[1], [0], [0], [1], [0, 0, 1, 1], [], []>} : vector<16x32xbf16>, vector<32x32xbf16>, vector<16x32xf32> -> vector<16x32xf32>
    %115 = arith.addf %110, %114 : vector<16x32xf32>
    %116 = vector.extract_strided_slice %0 {offsets = [9, 0], sizes = [1, 32], strides = [1, 1]} : vector<14x64xf32> to vector<1x32xf32>
    %117 = vector.broadcast %116 : vector<1x32xf32> to vector<16x32xf32>
    %118 = arith.mulf %115, %117 : vector<16x32xf32>
    %119 = vector.extract_strided_slice %0 {offsets = [10, 0], sizes = [1, 32], strides = [1, 1]} : vector<14x64xf32> to vector<1x32xf32>
    %120 = vector.broadcast %119 : vector<1x32xf32> to vector<16x32xf32>
    %121 = arith.addf %118, %120 : vector<16x32xf32>
    %cst_66 = arith.constant 0.000000e+00 : f32
    %122 = vector.broadcast %cst_66 : f32 to vector<16x32xf32>
    %123 = arith.cmpf oge, %121, %122 : vector<16x32xf32>
    %124 = vector.extract_strided_slice %0 {offsets = [11, 0], sizes = [1, 32], strides = [1, 1]} : vector<14x64xf32> to vector<1x32xf32>
    %125 = vector.broadcast %124 : vector<1x32xf32> to vector<16x32xf32>
    %126 = arith.mulf %125, %121 : vector<16x32xf32>
    %127 = arith.select %123, %121, %126 : vector<16x32xi1>, vector<16x32xf32>
    %128 = arith.addf %127, %97 : vector<16x32xf32>
    %cst_67 = arith.constant 0.000000e+00 : f32
    %129 = vector.broadcast %cst_67 : f32 to vector<4x32xf32>
    %130 = vector.extract_strided_slice %128 {offsets = [0, 0], sizes = [4, 32], strides = [1, 1]} : vector<16x32xf32> to vector<4x32xf32>
    %131 = arith.truncf %130 : vector<4x32xf32> to vector<4x32xbf16>
    %c0_68 = arith.constant 0 : index
    %c0_69 = arith.constant 0 : index
    %c0_70 = arith.constant 0 : index
    %132 = vector.load %arg11[%c0_68, %c0_69, %c0_70] : memref<4x32x32xbf16, #tpu.memory_space<vmem>>, vector<1x32x32xbf16>
    %133 = vector.shape_cast %132 : vector<1x32x32xbf16> to vector<32x32xbf16>
    %cst_71 = arith.constant dense<0.000000e+00> : vector<4x32xf32>
    %134 = tpu.matmul %131, %133, %cst_71 {dimension_numbers = #tpu.dot_dimension_numbers<[1], [0], [0], [1], [0, 0, 1, 1], [], []>} : vector<4x32xbf16>, vector<32x32xbf16>, vector<4x32xf32> -> vector<4x32xf32>
    %135 = arith.addf %129, %134 : vector<4x32xf32>
    %136 = vector.extract_strided_slice %128 {offsets = [4, 0], sizes = [4, 32], strides = [1, 1]} : vector<16x32xf32> to vector<4x32xf32>
    %137 = arith.truncf %136 : vector<4x32xf32> to vector<4x32xbf16>
    %c1_72 = arith.constant 1 : index
    %c0_73 = arith.constant 0 : index
    %c0_74 = arith.constant 0 : index
    %138 = vector.load %arg11[%c1_72, %c0_73, %c0_74] : memref<4x32x32xbf16, #tpu.memory_space<vmem>>, vector<1x32x32xbf16>
    %139 = vector.shape_cast %138 : vector<1x32x32xbf16> to vector<32x32xbf16>
    %cst_75 = arith.constant dense<0.000000e+00> : vector<4x32xf32>
    %140 = tpu.matmul %137, %139, %cst_75 {dimension_numbers = #tpu.dot_dimension_numbers<[1], [0], [0], [1], [0, 0, 1, 1], [], []>} : vector<4x32xbf16>, vector<32x32xbf16>, vector<4x32xf32> -> vector<4x32xf32>
    %141 = arith.addf %135, %140 : vector<4x32xf32>
    %142 = vector.extract_strided_slice %128 {offsets = [8, 0], sizes = [4, 32], strides = [1, 1]} : vector<16x32xf32> to vector<4x32xf32>
    %143 = arith.truncf %142 : vector<4x32xf32> to vector<4x32xbf16>
    %c2_76 = arith.constant 2 : index
    %c0_77 = arith.constant 0 : index
    %c0_78 = arith.constant 0 : index
    %144 = vector.load %arg11[%c2_76, %c0_77, %c0_78] : memref<4x32x32xbf16, #tpu.memory_space<vmem>>, vector<1x32x32xbf16>
    %145 = vector.shape_cast %144 : vector<1x32x32xbf16> to vector<32x32xbf16>
    %cst_79 = arith.constant dense<0.000000e+00> : vector<4x32xf32>
    %146 = tpu.matmul %143, %145, %cst_79 {dimension_numbers = #tpu.dot_dimension_numbers<[1], [0], [0], [1], [0, 0, 1, 1], [], []>} : vector<4x32xbf16>, vector<32x32xbf16>, vector<4x32xf32> -> vector<4x32xf32>
    %147 = arith.addf %141, %146 : vector<4x32xf32>
    %148 = vector.extract_strided_slice %128 {offsets = [12, 0], sizes = [4, 32], strides = [1, 1]} : vector<16x32xf32> to vector<4x32xf32>
    %149 = arith.truncf %148 : vector<4x32xf32> to vector<4x32xbf16>
    %c3 = arith.constant 3 : index
    %c0_80 = arith.constant 0 : index
    %c0_81 = arith.constant 0 : index
    %150 = vector.load %arg11[%c3, %c0_80, %c0_81] : memref<4x32x32xbf16, #tpu.memory_space<vmem>>, vector<1x32x32xbf16>
    %151 = vector.shape_cast %150 : vector<1x32x32xbf16> to vector<32x32xbf16>
    %cst_82 = arith.constant dense<0.000000e+00> : vector<4x32xf32>
    %152 = tpu.matmul %149, %151, %cst_82 {dimension_numbers = #tpu.dot_dimension_numbers<[1], [0], [0], [1], [0, 0, 1, 1], [], []>} : vector<4x32xbf16>, vector<32x32xbf16>, vector<4x32xf32> -> vector<4x32xf32>
    %153 = arith.addf %147, %152 : vector<4x32xf32>
    %154 = vector.extract_strided_slice %0 {offsets = [12, 0], sizes = [1, 32], strides = [1, 1]} : vector<14x64xf32> to vector<1x32xf32>
    %155 = vector.broadcast %154 : vector<1x32xf32> to vector<4x32xf32>
    %156 = arith.mulf %153, %155 : vector<4x32xf32>
    %157 = vector.extract_strided_slice %0 {offsets = [13, 0], sizes = [1, 32], strides = [1, 1]} : vector<14x64xf32> to vector<1x32xf32>
    %158 = vector.broadcast %157 : vector<1x32xf32> to vector<4x32xf32>
    %159 = arith.addf %156, %158 : vector<4x32xf32>
    %c0_83 = arith.constant 0 : index
    %c0_84 = arith.constant 0 : index
    %c0_85 = arith.constant 0 : index
    %160 = vector.load %arg12[%c0_83, %c0_84, %c0_85] : memref<1x4x32xf32, #tpu.memory_space<vmem>>, vector<1x4x32xf32>
    %161 = vector.shape_cast %160 : vector<1x4x32xf32> to vector<4x32xf32>
    %162 = vector.shape_cast %159 : vector<4x32xf32> to vector<1x4x32xf32>
    tpu.vector_store %arg12[%c0_83, %c0_84, %c0_85], %162 {strides = array<i32>} : memref<1x4x32xf32, #tpu.memory_space<vmem>>, vector<1x4x32xf32>,
    return
  }
  func.func @transform_0(%arg0: i32) -> (i32, i32, i32) {
    %c0_i32 = arith.constant 0 : i32
    %c0_i32_0 = arith.constant 0 : i32
    %c0_i32_1 = arith.constant 0 : i32
    return %arg0, %c0_i32, %c0_i32_0 : i32, i32, i32
  }
  func.func @transform_1(%arg0: i32) -> (i32, i32) {
    %c0_i32 = arith.constant 0 : i32
    %c0_i32_0 = arith.constant 0 : i32
    %c0_i32_1 = arith.constant 0 : i32
    return %c0_i32, %c0_i32_0 : i32, i32
  }
  func.func @transform_2(%arg0: i32) -> (i32, i32, i32) {
    %c0_i32 = arith.constant 0 : i32
    %c0_i32_0 = arith.constant 0 : i32
    %c0_i32_1 = arith.constant 0 : i32
    %c0_i32_2 = arith.constant 0 : i32
    return %c0_i32, %c0_i32_0, %c0_i32_1 : i32, i32, i32
  }
  func.func @transform_3(%arg0: i32) -> (i32, i32) {
    %c0_i32 = arith.constant 0 : i32
    %c0_i32_0 = arith.constant 0 : i32
    %c0_i32_1 = arith.constant 0 : i32
    return %c0_i32, %c0_i32_0 : i32, i32
  }
  func.func @transform_4(%arg0: i32) -> (i32, i32, i32) {
    %c0_i32 = arith.constant 0 : i32
    %c0_i32_0 = arith.constant 0 : i32
    %c0_i32_1 = arith.constant 0 : i32
    %c0_i32_2 = arith.constant 0 : i32
    return %c0_i32, %c0_i32_0, %c0_i32_1 : i32, i32, i32
  }
  func.func @transform_5(%arg0: i32) -> (i32, i32) {
    %c0_i32 = arith.constant 0 : i32
    %c0_i32_0 = arith.constant 0 : i32
    %c0_i32_1 = arith.constant 0 : i32
    return %c0_i32, %c0_i32_0 : i32, i32
  }
  func.func @transform_6(%arg0: i32) -> (i32, i32, i32) {
    %c0_i32 = arith.constant 0 : i32
    %c0_i32_0 = arith.constant 0 : i32
    %c0_i32_1 = arith.constant 0 : i32
    %c0_i32_2 = arith.constant 0 : i32
    return %c0_i32, %c0_i32_0, %c0_i32_1 : i32, i32, i32
  }
  func.func @transform_7(%arg0: i32) -> (i32, i32) {
    %c0_i32 = arith.constant 0 : i32
    %c0_i32_0 = arith.constant 0 : i32
    %c0_i32_1 = arith.constant 0 : i32
    return %c0_i32, %c0_i32_0 : i32, i32
  }
  func.func @transform_8(%arg0: i32) -> (i32, i32, i32) {
    %c0_i32 = arith.constant 0 : i32
    %c0_i32_0 = arith.constant 0 : i32
    %c0_i32_1 = arith.constant 0 : i32
    %c0_i32_2 = arith.constant 0 : i32
    return %c0_i32, %c0_i32_0, %c0_i32_1 : i32, i32, i32
  }
  func.func @transform_9(%arg0: i32) -> (i32, i32) {
    %c0_i32 = arith.constant 0 : i32
    %c0_i32_0 = arith.constant 0 : i32
    %c0_i32_1 = arith.constant 0 : i32
    return %c0_i32, %c0_i32_0 : i32, i32
  }
  func.func @transform_10(%arg0: i32) -> (i32, i32, i32) {
    %c0_i32 = arith.constant 0 : i32
    %c0_i32_0 = arith.constant 0 : i32
    %c0_i32_1 = arith.constant 0 : i32
    %c0_i32_2 = arith.constant 0 : i32
    return %c0_i32, %c0_i32_0, %c0_i32_1 : i32, i32, i32
  }
  func.func @transform_11(%arg0: i32) -> (i32, i32, i32) {
    %c0_i32 = arith.constant 0 : i32
    %c0_i32_0 = arith.constant 0 : i32
    %c0_i32_1 = arith.constant 0 : i32
    return %arg0, %c0_i32, %c0_i32_0 : i32, i32, i32
  }
}

</mosaic_0001>

<llo_original>
// kernel: tpu_custom_call.1
$region0: #{tpu_custom_call.1}
  #allocation0 [shape = 'u32[]', space=smem, size = 0x4, offset = 0x4, fixed_abs, tag = 'smem constant byte address 0x4 - core index']
  #allocation1 [shape = 'u32[144,128]{1,0:T(1,128)}', space=vmem, size = 0x12000, scoped, tag = 'internal scratch']
  %s0 = inlined_call_operand.vmem [shape: f32[2,64,16], index: 0, kind: input, shape index: {}]
  %s1 = inlined_call_operand.vmem [shape: bf16[96,64], index: 1, kind: input, shape index: {}]
  %s2 = inlined_call_operand.vmem [shape: bf16[3,16,64], index: 2, kind: input, shape index: {}]
  %s3 = inlined_call_operand.vmem [shape: bf16[96,32], index: 3, kind: input, shape index: {}]
  %s4 = inlined_call_operand.vmem [shape: bf16[3,64,64], index: 4, kind: input, shape index: {}]
  %s5 = inlined_call_operand.vmem [shape: bf16[48,32], index: 5, kind: input, shape index: {}]
  %s6 = inlined_call_operand.vmem [shape: bf16[3,64,32], index: 6, kind: input, shape index: {}]
  %s7 = inlined_call_operand.vmem [shape: bf16[48,16], index: 7, kind: input, shape index: {}]
  %s8 = inlined_call_operand.vmem [shape: bf16[3,32,32], index: 8, kind: input, shape index: {}]
  %s9 = inlined_call_operand.vmem [shape: f32[14,64], index: 9, kind: input, shape index: {}]
  %s10 = inlined_call_operand.vmem [shape: bf16[4,32,32], index: 10, kind: input, shape index: {}]
  %s11 = inlined_call_operand.hbm [shape: f32[2,4,32], index: 11, kind: output, shape index: {}]
  %s12 = sld [smem:[#allocation0]]
  $region77: #{tpu_custom_call.1} parent=0
    _
  %s14 = ssub.s32 1, %s12
  %s15 = scalar_select 0, %s14, %s12
  $region1: #{tpu_custom_call.1} parent=0
    #allocation2 [shape = 'u8[4096]{0}', space=vmem, size = 0x1000, scoped, tag = 'output window, operand 0']
    #allocation3 [shape = 's32[2]{0}', space=sflag, size = 0x8, scoped, tag = 'scoped memory for tpu_custom_call.1']
    %16 = vsyncpa [#allocation3], 0
    %s17 = scalar_lea.sflag [#allocation3], 1
    %18 = vsyncpa %s17, 0
    loop: start=0, step=1, limit=4
    $region2: #{tpu_custom_call.1} parent=1 // loop_pre_header
      _
    $region3: #{tpu_custom_call.1} parent=1 // loop_header
      %s20 = sphi 0, %s24
      %p21 = scmp.ge.s32.totalorder %s20, 4
      %s30 = sphi 0, %s32
      %s33 = sphi 0, %s30
      %s34 = sphi 0, %s33
      %s50 = sphi 0, %s34
      %s54 = sphi 0, %s54
      %s56 = sphi 0, %s54
      %s57 = sphi 0, %s56
      %s71 = sphi 0, %s57
      %s75 = sphi 0, %s75
      %s77 = sphi 0, %s75
      %s78 = sphi 0, %s77
      %s92 = sphi 0, %s78
      %s96 = sphi 0, %s96
      %s98 = sphi 0, %s96
      %s99 = sphi 0, %s98
      %s113 = sphi 0, %s99
      %s117 = sphi 0, %s117
      %s119 = sphi 0, %s117
      %s120 = sphi 0, %s119
      %s134 = sphi 0, %s120
      %s138 = sphi 0, %s138
      %s140 = sphi 0, %s138
      %s141 = sphi 0, %s140
      %s155 = sphi 0, %s141
      %s159 = sphi 0, %s159
      %s161 = sphi 0, %s159
      %s162 = sphi 0, %s161
      %s176 = sphi 0, %s162
      %s180 = sphi 0, %s180
      %s182 = sphi 0, %s180
      %s183 = sphi 0, %s182
      %s197 = sphi 0, %s183
      %s201 = sphi 0, %s201
      %s203 = sphi 0, %s201
      %s204 = sphi 0, %s203
      %s218 = sphi 0, %s204
      %s222 = sphi 0, %s222
      %s224 = sphi 0, %s222
      %s225 = sphi 0, %s224
      %s239 = sphi 0, %s225
      %s243 = sphi 0, %s243
      %s245 = sphi 0, %s243
      %s246 = sphi 0, %s245
      %s260 = sphi 0, %s246
      %s266 = sphi 0, %s268
      %s269 = sphi 0, %s266
      %s270 = sphi 0, %s269
      %s286 = sphi 0, %s270
    $region4: #{tpu_custom_call.1} parent=1 // loop_header_branch
      %23 = sbr.rel (%p21) target = $region8
    $region5: #{tpu_custom_call.1} parent=1 // loop_body
      %s25 = ssub.s32 %s20, 1
      %s26 = ssub.s32 %s20, 2
      %s27 = sadd.s32 %s20, 1
      %s28 = ssub.s32 %s20, %s27
      %p29 = scmp.eq.s32.totalorder %s28, 0
      %s31 = sadd.s32 %s30, 1
      %s32 = scalar_select %p29, %s30, %s31
      %p35 = pneg %p29
      %p36 = scmp.eq.s32.totalorder %s20, 1
      %p37 = por %p35, %p36
      %p38 = scmp.ne.s32.totalorder %s30, %s33
      %p39 = scmp.eq.s32.totalorder %s20, 0
      %p40 = por %p38, %p39
      %p41 = scmp.ne.s32.totalorder %s30, %s33
      %p42 = scmp.eq.s32.totalorder %s25, 1
      %p43 = por %p41, %p42
      %p44 = scmp.ne.s32.totalorder %s33, %s34
      %p45 = scmp.eq.s32.totalorder %s25, 0
      %p46 = por %p44, %p45
      %p47 = scmp.ne.s32.totalorder %s33, %s34
      %p48 = scmp.eq.s32.totalorder %s26, 1
      %p49 = por %p47, %p48
      %p51 = scmp.ne.s32.totalorder %s34, %s50
      %p52 = scmp.eq.s32.totalorder %s26, 0
      %p53 = por %p51, %p52
      %s55 = sadd.s32 %s54, 1
      %p58 = scmp.eq.s32.totalorder %s20, 1
      %p59 = scmp.ne.s32.totalorder %s54, %s56
      %p60 = scmp.eq.s32.totalorder %s20, 0
      %p61 = por %p59, %p60
      %p62 = scmp.ne.s32.totalorder %s54, %s56
      %p63 = scmp.eq.s32.totalorder %s25, 1
      %p64 = por %p62, %p63
      %p65 = scmp.ne.s32.totalorder %s56, %s57
      %p66 = scmp.eq.s32.totalorder %s25, 0
      %p67 = por %p65, %p66
      %p68 = scmp.ne.s32.totalorder %s56, %s57
      %p69 = scmp.eq.s32.totalorder %s26, 1
      %p70 = por %p68, %p69
      %p72 = scmp.ne.s32.totalorder %s57, %s71
      %p73 = scmp.eq.s32.totalorder %s26, 0
      %p74 = por %p72, %p73
      %s76 = sadd.s32 %s75, 1
      %p79 = scmp.eq.s32.totalorder %s20, 1
      %p80 = scmp.ne.s32.totalorder %s75, %s77
      %p81 = scmp.eq.s32.totalorder %s20, 0
      %p82 = por %p80, %p81
      %p83 = scmp.ne.s32.totalorder %s75, %s77
      %p84 = scmp.eq.s32.totalorder %s25, 1
      %p85 = por %p83, %p84
      %p86 = scmp.ne.s32.totalorder %s77, %s78
      %p87 = scmp.eq.s32.totalorder %s25, 0
      %p88 = por %p86, %p87
      %p89 = scmp.ne.s32.totalorder %s77, %s78
      %p90 = scmp.eq.s32.totalorder %s26, 1
      %p91 = por %p89, %p90
      %p93 = scmp.ne.s32.totalorder %s78, %s92
      %p94 = scmp.eq.s32.totalorder %s26, 0
      %p95 = por %p93, %p94
      %s97 = sadd.s32 %s96, 1
      %p100 = scmp.eq.s32.totalorder %s20, 1
      %p101 = scmp.ne.s32.totalorder %s96, %s98
      %p102 = scmp.eq.s32.totalorder %s20, 0
      %p103 = por %p101, %p102
      %p104 = scmp.ne.s32.totalorder %s96, %s98
      %p105 = scmp.eq.s32.totalorder %s25, 1
      %p106 = por %p104, %p105
      %p107 = scmp.ne.s32.totalorder %s98, %s99
      %p108 = scmp.eq.s32.totalorder %s25, 0
      %p109 = por %p107, %p108
      %p110 = scmp.ne.s32.totalorder %s98, %s99
      %p111 = scmp.eq.s32.totalorder %s26, 1
      %p112 = por %p110, %p111
      %p114 = scmp.ne.s32.totalorder %s99, %s113
      %p115 = scmp.eq.s32.totalorder %s26, 0
      %p116 = por %p114, %p115
      %s118 = sadd.s32 %s117, 1
      %p121 = scmp.eq.s32.totalorder %s20, 1
      %p122 = scmp.ne.s32.totalorder %s117, %s119
      %p123 = scmp.eq.s32.totalorder %s20, 0
      %p124 = por %p122, %p123
      %p125 = scmp.ne.s32.totalorder %s117, %s119
      %p126 = scmp.eq.s32.totalorder %s25, 1
      %p127 = por %p125, %p126
      %p128 = scmp.ne.s32.totalorder %s119, %s120
      %p129 = scmp.eq.s32.totalorder %s25, 0
      %p130 = por %p128, %p129
      %p131 = scmp.ne.s32.totalorder %s119, %s120
      %p132 = scmp.eq.s32.totalorder %s26, 1
      %p133 = por %p131, %p132
      %p135 = scmp.ne.s32.totalorder %s120, %s134
      %p136 = scmp.eq.s32.totalorder %s26, 0
      %p137 = por %p135, %p136
      %s139 = sadd.s32 %s138, 1
      %p142 = scmp.eq.s32.totalorder %s20, 1
      %p143 = scmp.ne.s32.totalorder %s138, %s140
      %p144 = scmp.eq.s32.totalorder %s20, 0
      %p145 = por %p143, %p144
      %p146 = scmp.ne.s32.totalorder %s138, %s140
      %p147 = scmp.eq.s32.totalorder %s25, 1
      %p148 = por %p146, %p147
      %p149 = scmp.ne.s32.totalorder %s140, %s141
      %p150 = scmp.eq.s32.totalorder %s25, 0
      %p151 = por %p149, %p150
      %p152 = scmp.ne.s32.totalorder %s140, %s141
      %p153 = scmp.eq.s32.totalorder %s26, 1
      %p154 = por %p152, %p153
      %p156 = scmp.ne.s32.totalorder %s141, %s155
      %p157 = scmp.eq.s32.totalorder %s26, 0
      %p158 = por %p156, %p157
      %s160 = sadd.s32 %s159, 1
      %p163 = scmp.eq.s32.totalorder %s20, 1
      %p164 = scmp.ne.s32.totalorder %s159, %s161
      %p165 = scmp.eq.s32.totalorder %s20, 0
      %p166 = por %p164, %p165
      %p167 = scmp.ne.s32.totalorder %s159, %s161
      %p168 = scmp.eq.s32.totalorder %s25, 1
      %p169 = por %p167, %p168
      %p170 = scmp.ne.s32.totalorder %s161, %s162
      %p171 = scmp.eq.s32.totalorder %s25, 0
      %p172 = por %p170, %p171
      %p173 = scmp.ne.s32.totalorder %s161, %s162
      %p174 = scmp.eq.s32.totalorder %s26, 1
      %p175 = por %p173, %p174
      %p177 = scmp.ne.s32.totalorder %s162, %s176
      %p178 = scmp.eq.s32.totalorder %s26, 0
      %p179 = por %p177, %p178
      %s181 = sadd.s32 %s180, 1
      %p184 = scmp.eq.s32.totalorder %s20, 1
      %p185 = scmp.ne.s32.totalorder %s180, %s182
      %p186 = scmp.eq.s32.totalorder %s20, 0
      %p187 = por %p185, %p186
      %p188 = scmp.ne.s32.totalorder %s180, %s182
      %p189 = scmp.eq.s32.totalorder %s25, 1
      %p190 = por %p188, %p189
      %p191 = scmp.ne.s32.totalorder %s182, %s183
      %p192 = scmp.eq.s32.totalorder %s25, 0
      %p193 = por %p191, %p192
      %p194 = scmp.ne.s32.totalorder %s182, %s183
      %p195 = scmp.eq.s32.totalorder %s26, 1
      %p196 = por %p194, %p195
      %p198 = scmp.ne.s32.totalorder %s183, %s197
      %p199 = scmp.eq.s32.totalorder %s26, 0
      %p200 = por %p198, %p199
      %s202 = sadd.s32 %s201, 1
      %p205 = scmp.eq.s32.totalorder %s20, 1
      %p206 = scmp.ne.s32.totalorder %s201, %s203
      %p207 = scmp.eq.s32.totalorder %s20, 0
      %p208 = por %p206, %p207
      %p209 = scmp.ne.s32.totalorder %s201, %s203
      %p210 = scmp.eq.s32.totalorder %s25, 1
      %p211 = por %p209, %p210
      %p212 = scmp.ne.s32.totalorder %s203, %s204
      %p213 = scmp.eq.s32.totalorder %s25, 0
      %p214 = por %p212, %p213
      %p215 = scmp.ne.s32.totalorder %s203, %s204
      %p216 = scmp.eq.s32.totalorder %s26, 1
      %p217 = por %p215, %p216
      %p219 = scmp.ne.s32.totalorder %s204, %s218
      %p220 = scmp.eq.s32.totalorder %s26, 0
      %p221 = por %p219, %p220
      %s223 = sadd.s32 %s222, 1
      %p226 = scmp.eq.s32.totalorder %s20, 1
      %p227 = scmp.ne.s32.totalorder %s222, %s224
      %p228 = scmp.eq.s32.totalorder %s20, 0
      %p229 = por %p227, %p228
      %p230 = scmp.ne.s32.totalorder %s222, %s224
      %p231 = scmp.eq.s32.totalorder %s25, 1
      %p232 = por %p230, %p231
      %p233 = scmp.ne.s32.totalorder %s224, %s225
      %p234 = scmp.eq.s32.totalorder %s25, 0
      %p235 = por %p233, %p234
      %p236 = scmp.ne.s32.totalorder %s224, %s225
      %p237 = scmp.eq.s32.totalorder %s26, 1
      %p238 = por %p236, %p237
      %p240 = scmp.ne.s32.totalorder %s225, %s239
      %p241 = scmp.eq.s32.totalorder %s26, 0
      %p242 = por %p240, %p241
      %s244 = sadd.s32 %s243, 1
      %p247 = scmp.eq.s32.totalorder %s20, 1
      %p248 = scmp.ne.s32.totalorder %s243, %s245
      %p249 = scmp.eq.s32.totalorder %s20, 0
      %p250 = por %p248, %p249
      %p251 = scmp.ne.s32.totalorder %s243, %s245
      %p252 = scmp.eq.s32.totalorder %s25, 1
      %p253 = por %p251, %p252
      %p254 = scmp.ne.s32.totalorder %s245, %s246
      %p255 = scmp.eq.s32.totalorder %s25, 0
      %p256 = por %p254, %p255
      %p257 = scmp.ne.s32.totalorder %s245, %s246
      %p258 = scmp.eq.s32.totalorder %s26, 1
      %p259 = por %p257, %p258
      %p261 = scmp.ne.s32.totalorder %s246, %s260
      %p262 = scmp.eq.s32.totalorder %s26, 0
      %p263 = por %p261, %p262
      %s264 = ssub.s32 %s20, %s27
      %p265 = scmp.eq.s32.totalorder %s264, 0
      %s267 = sadd.s32 %s266, 1
      %s268 = scalar_select %p265, %s266, %s267
      %p271 = pneg %p265
      %p272 = scmp.eq.s32.totalorder %s20, 1
      %p273 = por %p271, %p272
      %p274 = scmp.ne.s32.totalorder %s266, %s269
      %p275 = scmp.eq.s32.totalorder %s20, 0
      %p276 = por %p274, %p275
      %p277 = scmp.ne.s32.totalorder %s266, %s269
      %p278 = scmp.eq.s32.totalorder %s25, 1
      %p279 = por %p277, %p278
      %p280 = scmp.ne.s32.totalorder %s269, %s270
      %p281 = scmp.eq.s32.totalorder %s25, 0
      %p282 = por %p280, %p281
      %p283 = scmp.ne.s32.totalorder %s269, %s270
      %p284 = scmp.eq.s32.totalorder %s26, 1
      %p285 = por %p283, %p284
      %p287 = scmp.ne.s32.totalorder %s270, %s286
      %p288 = scmp.eq.s32.totalorder %s26, 0
      %p289 = por %p287, %p288
      %p290 = scmp.le.s32.totalorder 1, %s20
      %p291 = scmp.lt.s32.totalorder %s20, 3
      %p292 = pnand %p290, %p291
      %p293 = pneg %p292
      // Predicated region
      $region9: #{tpu_custom_call.1} parent=5 // pred_check
        _
      $region10: #{tpu_custom_call.1} parent=5 // pred_check_branch
        %295 = sbr.rel (%p292) target = $region12
      $region11: #{tpu_custom_call.1} parent=5 // pred_region
        %s296 = ssub.s32 %s20, 1
        // Predicated region
        $region13: #{tpu_custom_call.1} parent=11 // pred_check
          %p297 = pneg %p67
        $region14: #{tpu_custom_call.1} parent=11 // pred_check_branch
          %299 = sbr.rel (%p297) target = $region16
        $region15: #{tpu_custom_call.1} parent=11 // pred_region
          _
        $region16: #{tpu_custom_call.1} parent=11 // pred_fallthru
          _
        // Predicated region
        $region17: #{tpu_custom_call.1} parent=11 // pred_check
          %p300 = pneg %p88
        $region18: #{tpu_custom_call.1} parent=11 // pred_check_branch
          %302 = sbr.rel (%p300) target = $region20
        $region19: #{tpu_custom_call.1} parent=11 // pred_region
          _
        $region20: #{tpu_custom_call.1} parent=11 // pred_fallthru
          _
        // Predicated region
        $region21: #{tpu_custom_call.1} parent=11 // pred_check
          %p303 = pneg %p109
        $region22: #{tpu_custom_call.1} parent=11 // pred_check_branch
          %305 = sbr.rel (%p303) target = $region24
        $region23: #{tpu_custom_call.1} parent=11 // pred_region
          _
        $region24: #{tpu_custom_call.1} parent=11 // pred_fallthru
          _
        // Predicated region
        $region25: #{tpu_custom_call.1} parent=11 // pred_check
          %p306 = pneg %p130
        $region26: #{tpu_custom_call.1} parent=11 // pred_check_branch
          %308 = sbr.rel (%p306) target = $region28
        $region27: #{tpu_custom_call.1} parent=11 // pred_region
          _
        $region28: #{tpu_custom_call.1} parent=11 // pred_fallthru
          _
        // Predicated region
        $region29: #{tpu_custom_call.1} parent=11 // pred_check
          %p309 = pneg %p151
        $region30: #{tpu_custom_call.1} parent=11 // pred_check_branch
          %311 = sbr.rel (%p309) target = $region32
        $region31: #{tpu_custom_call.1} parent=11 // pred_region
          _
        $region32: #{tpu_custom_call.1} parent=11 // pred_fallthru
          _
        // Predicated region
        $region33: #{tpu_custom_call.1} parent=11 // pred_check
          %p312 = pneg %p172
        $region34: #{tpu_custom_call.1} parent=11 // pred_check_branch
          %314 = sbr.rel (%p312) target = $region36
        $region35: #{tpu_custom_call.1} parent=11 // pred_region
          _
        $region36: #{tpu_custom_call.1} parent=11 // pred_fallthru
          _
        // Predicated region
        $region37: #{tpu_custom_call.1} parent=11 // pred_check
          %p315 = pneg %p193
        $region38: #{tpu_custom_call.1} parent=11 // pred_check_branch
          %317 = sbr.rel (%p315) target = $region40
        $region39: #{tpu_custom_call.1} parent=11 // pred_region
          _
        $region40: #{tpu_custom_call.1} parent=11 // pred_fallthru
          _
        // Predicated region
        $region41: #{tpu_custom_call.1} parent=11 // pred_check
          %p318 = pneg %p214
        $region42: #{tpu_custom_call.1} parent=11 // pred_check_branch
          %320 = sbr.rel (%p318) target = $region44
        $region43: #{tpu_custom_call.1} parent=11 // pred_region
          _
        $region44: #{tpu_custom_call.1} parent=11 // pred_fallthru
          _
        // Predicated region
        $region45: #{tpu_custom_call.1} parent=11 // pred_check
          %p321 = pneg %p235
        $region46: #{tpu_custom_call.1} parent=11 // pred_check_branch
          %323 = sbr.rel (%p321) target = $region48
        $region47: #{tpu_custom_call.1} parent=11 // pred_region
          _
        $region48: #{tpu_custom_call.1} parent=11 // pred_fallthru
          _
        // Predicated region
        $region49: #{tpu_custom_call.1} parent=11 // pred_check
          %p324 = pneg %p256
        $region50: #{tpu_custom_call.1} parent=11 // pred_check_branch
          %326 = sbr.rel (%p324) target = $region52
        $region51: #{tpu_custom_call.1} parent=11 // pred_region
          _
        $region52: #{tpu_custom_call.1} parent=11 // pred_fallthru
          _
      $region12: #{tpu_custom_call.1} parent=5 // pred_fallthru
        _
      %p327 = scmp.lt.s32.totalorder %s20, 2
      // Predicated region
      $region53: #{tpu_custom_call.1} parent=5 // pred_check
        %p328 = pneg %p327
      $region54: #{tpu_custom_call.1} parent=5 // pred_check_branch
        %330 = sbr.rel (%p328) target = $region56
      $region55: #{tpu_custom_call.1} parent=5 // pred_region
        // Predicated region
        $region57: #{tpu_custom_call.1} parent=55 // pred_check
          %p331 = pneg %p40
        $region58: #{tpu_custom_call.1} parent=55 // pred_check_branch
          %333 = sbr.rel (%p331) target = $region60
        $region59: #{tpu_custom_call.1} parent=55 // pred_region
          %p334 = scmp.lt.s32.totalorder %s20, 1
          %s335 = scalar_select %p334, %s20, 1
          %s336 = smul.addr %s335, 8
          %s337 = smul.addr %s336, 8
          %s338 = scalar_lea.vmem %s0, %s337
        $region60: #{tpu_custom_call.1} parent=55 // pred_fallthru
          _
      $region56: #{tpu_custom_call.1} parent=5 // pred_fallthru
        _
      %p339 = scmp.le.s32.totalorder 1, %s20
      %p340 = scmp.lt.s32.totalorder %s20, 3
      %p341 = pnand %p339, %p340
      %p342 = pneg %p341
      // Predicated region
      $region61: #{tpu_custom_call.1} parent=5 // pred_check
        _
      $region62: #{tpu_custom_call.1} parent=5 // pred_check_branch
        %344 = sbr.rel (%p341) target = $region64
      $region63: #{tpu_custom_call.1} parent=5 // pred_region
        %s345 = ssub.s32 %s20, 1
        %p346 = scmp.lt.s32.totalorder %s25, 1
        %s347 = scalar_select %p346, %s25, 1
        %s348 = smul.addr %s347, 8
        %s349 = smul.addr %s348, 8
        %s350 = scalar_lea.vmem %s0, %s349
        %p351 = pneg %p46
        %p352 = pneg %p43
        %p353 = pneg %p67
        %p354 = pneg %p64
        %p355 = pneg %p88
        %p356 = pneg %p85
        %p357 = pneg %p109
        %p358 = pneg %p106
        %p359 = pneg %p130
        %p360 = pneg %p127
        %p361 = pneg %p151
        %p362 = pneg %p148
        %p363 = pneg %p172
        %p364 = pneg %p169
        %p365 = pneg %p193
        %p366 = pneg %p190
        %p367 = pneg %p214
        %p368 = pneg %p211
        %p369 = pneg %p235
        %p370 = pneg %p232
        %p371 = pneg %p256
        %p372 = pneg %p253
        %p373 = pneg %p282
        %p374 = pneg %p279
        %s375 = sand.u32 %s269, 1
        %s376 = scalar_lea.sflag [#allocation3], %s375
        %s377 = sand.u32 %s269, 1
        %s378 = smul.addr %s377, 4
        %s379 = scalar_lea.vmem [#allocation2], %s378
        %p380 = scmp.lt.s32.totalorder %s25, 1
        %s381 = scalar_select %p380, %s25, 1
        %s382 = smul.addr %s381, 8
        %s383 = smul.addr %s382, 8
        %s384 = scalar_lea.vmem %s0, %s383
        %v386 = vld [vmem:[%s9] sm:$0xff]
        %v387 = vld [vmem:[%s9 + $0x8] sm:$0x3f]
        %v388 = vld [vmem:[%s384] sm:$0xff]
        %v389 = vld [vmem:[%s384 + $0x8] sm:$0xff]
        %v390 = vld [vmem:[%s384 + $0x10] sm:$0xff]
        %v391 = vld [vmem:[%s384 + $0x18] sm:$0xff]
        %v392 = vld [vmem:[%s384 + $0x20] sm:$0xff]
        %v393 = vld [vmem:[%s384 + $0x28] sm:$0xff]
        %v394 = vld [vmem:[%s384 + $0x30] sm:$0xff]
        %v395 = vld [vmem:[%s384 + $0x38] sm:$0xff]
        %v396 = vsub.f32 %v388, 128.0
        %v397 = vsub.f32 %v389, 128.0
        %v398 = vsub.f32 %v390, 128.0
        %v399 = vsub.f32 %v391, 128.0
        %v400 = vsub.f32 %v392, 128.0
        %v401 = vsub.f32 %v393, 128.0
        %v402 = vsub.f32 %v394, 128.0
        %v403 = vsub.f32 %v395, 128.0
        %v404 = vmul.f32 %v396, 0.0078125
        %v405 = vmul.f32 %v397, 0.0078125
        %v406 = vmul.f32 %v398, 0.0078125
        %v407 = vmul.f32 %v399, 0.0078125
        %v408 = vmul.f32 %v400, 0.0078125
        %v409 = vmul.f32 %v401, 0.0078125
        %v410 = vmul.f32 %v402, 0.0078125
        %v411 = vmul.f32 %v403, 0.0078125
        %v412 = vld [vmem:[%s1] sm:$0xf]
        %v413 = vld [vmem:[%s1 + $0x4] sm:$0xf]
        %v414 = vld [vmem:[%s1 + $0x8] sm:$0xf]
        %v415 = vld [vmem:[%s1 + $0xc] sm:$0xf]
        %v416 = vld [vmem:[%s1 + $0x10] sm:$0xf]
        %v417 = vld [vmem:[%s1 + $0x14] sm:$0xf]
        %v418 = vld [vmem:[%s1 + $0x18] sm:$0xf]
        %v419 = vld [vmem:[%s1 + $0x1c] sm:$0xf]
        %v420 = vld [vmem:[%s1 + $0x20] sm:$0xf]
        %v421 = vld [vmem:[%s1 + $0x24] sm:$0xf]
        %v422 = vld [vmem:[%s1 + $0x28] sm:$0xf]
        %v423 = vld [vmem:[%s1 + $0x2c] sm:$0xf]
        %v424 = vpack.c.bf16 %v405, %v404
        %v425 = vpack.c.bf16 %v407, %v406
        %v426 = vpack.c.bf16 %v409, %v408
        %v427 = vpack.c.bf16 %v411, %v410
        %v440 = vunpack.c.l.b16 %v412
        %v441 = vunpack.c.l.b16 %v413
        %v442 = vunpack.c.l.b16 %v414
        %v443 = vunpack.c.l.b16 %v415
        %v444 = vunpack.c.l.b16 %v416
        %v445 = vunpack.c.l.b16 %v417
        %v446 = vunpack.c.l.b16 %v418
        %v447 = vunpack.c.l.b16 %v419
        %v448 = vunpack.c.l.b16 %v420
        %v449 = vunpack.c.l.b16 %v421
        %v450 = vunpack.c.l.b16 %v422
        %v451 = vunpack.c.l.b16 %v423
        %v452 = vpack.c.b16 %v441, %v440
        %v453 = vpack.c.b16 %v443, %v442
        %v454 = vpack.c.b16 %v445, %v444
        %v455 = vpack.c.b16 %v447, %v446
        %v456 = vpack.c.b16 %v449, %v448
        %v457 = vpack.c.b16 %v451, %v450
        %vm458 = vcmask 523264
        %v460 = vsel %vm458, %v452, 0
        %v463 = vsel %vm458, %v453, 0
        %v466 = vsel %vm458, %v454, 0
        %v469 = vsel %vm458, %v455, 0
        %v472 = vsel %vm458, %v456, 0
        %v475 = vsel %vm458, %v457, 0
        %477 = vmatprep.subr.bf16.mxu0 0
        %478 = vmatpush1.bf16.msra.mxu0 %v424
        %479 = vmatprep.subr.bf16.mxu0 0
        %480 = vmatpush1.bf16.msra.mxu0 %v425
        %481 = vmatprep.subr.bf16.mxu0 0
        %482 = vmatpush1.bf16.msra.mxu0 %v426
        %483 = vmatprep.subr.bf16.mxu0 0
        %484 = vmatpush1.bf16.msra.mxu0 %v427
        %485 = vmatprep.subr.bf16.mxu0 0
        %486 = vmatpush1.bf16.msra.mxu0 0
        %487 = vmatprep.subr.bf16.mxu0 0
        %488 = vmatpush1.bf16.msra.mxu0 0
        %489 = vmatprep.subr.bf16.mxu0 0
        %490 = vmatpush1.bf16.msra.mxu0 0
        %491 = vmatprep.subr.bf16.mxu0 0
        %492 = vmatpush1.bf16.msra.mxu0 0
        %493 = vmatprep.subr.bf16.mxu0 0
        %494 = vmatpush1.bf16.msra.mxu0 0
        %495 = vmatprep.subr.bf16.mxu0 0
        %496 = vmatpush1.bf16.msra.mxu0 0
        %497 = vmatprep.subr.bf16.mxu0 0
        %498 = vmatpush1.bf16.msra.mxu0 0
        %499 = vmatprep.subr.bf16.mxu0 0
        %500 = vmatpush1.bf16.msra.mxu0 0
        %501 = vmatprep.subr.bf16.mxu0 0
        %502 = vmatpush1.bf16.msra.mxu0 0
        %503 = vmatprep.subr.bf16.mxu0 0
        %504 = vmatpush1.bf16.msra.mxu0 0
        %505 = vmatprep.subr.bf16.mxu0 0
        %506 = vmatpush1.bf16.msra.mxu0 0
        %507 = vmatprep.subr.bf16.mxu0 0
        %508 = vmatpush1.bf16.msra.mxu0 0
        %509 = vmatprep.mubr.bf16.mxu0 0
        %510 = vmatmul.mubr.bf16.gmra.mrb[0].mxu0 %v460
        %v511 = vpop.f32.mrb[0].mxu0
        %v512 = vadd.f32 0.0, %v511
        %v513 = vpop.f32.mrb[0].mxu0
        %v514 = vpop.f32.mrb[0].mxu0
        %v515 = vadd.f32 0.0, %v514
        %v516 = vpop.f32.mrb[0].mxu0
        %517 = vmatprep.mubr.bf16.mxu0 0
        %518 = vmatmul.mubr.bf16.gmra.mrb[0].mxu0 %v463
        %v519 = vpop.f32.mrb[0].mxu0
        %v520 = vadd.f32 0.0, %v519
        %v521 = vpop.f32.mrb[0].mxu0
        %v522 = vpop.f32.mrb[0].mxu0
        %v523 = vadd.f32 0.0, %v522
        %v524 = vpop.f32.mrb[0].mxu0
        %525 = vmatprep.mubr.bf16.mxu0 0
        %526 = vmatmul.mubr.bf16.gmra.mrb[0].mxu0 %v466
        %v527 = vpop.f32.mrb[0].mxu0
        %v528 = vadd.f32 0.0, %v527
        %v529 = vpop.f32.mrb[0].mxu0
        %v530 = vpop.f32.mrb[0].mxu0
        %v531 = vadd.f32 0.0, %v530
        %v532 = vpop.f32.mrb[0].mxu0
        %533 = vmatprep.mubr.bf16.mxu0 0
        %534 = vmatmul.mubr.bf16.gmra.mrb[0].mxu0 %v469
        %v535 = vpop.f32.mrb[0].mxu0
        %v536 = vadd.f32 0.0, %v535
        %v537 = vpop.f32.mrb[0].mxu0
        %v538 = vpop.f32.mrb[0].mxu0
        %v539 = vadd.f32 0.0, %v538
        %v540 = vpop.f32.mrb[0].mxu0
        %541 = vmatprep.mubr.bf16.mxu0 0
        %542 = vmatmul.mubr.bf16.gmra.mrb[0].mxu0 %v472
        %v543 = vpop.f32.mrb[0].mxu0
        %v544 = vadd.f32 0.0, %v543
        %v545 = vpop.f32.mrb[0].mxu0
        %v546 = vpop.f32.mrb[0].mxu0
        %v547 = vadd.f32 0.0, %v546
        %v548 = vpop.f32.mrb[0].mxu0
        %549 = vmatprep.mubr.bf16.mxu0 0
        %550 = vmatmul.mubr.bf16.gmra.mrb[0].mxu0 %v475
        %v551 = vpop.f32.mrb[0].mxu0
        %v552 = vadd.f32 0.0, %v551
        %v553 = vpop.f32.mrb[0].mxu0
        %v554 = vpop.f32.mrb[0].mxu0
        %v555 = vadd.f32 0.0, %v554
        %v556 = vpop.f32.mrb[0].mxu0
        %557 = vdwg.mxu0
        %v558 = vpack.c.bf16 %v515, %v512
        %v559 = vpack.c.bf16 %v523, %v520
        %v560 = vpack.c.bf16 %v531, %v528
        %v561 = vpack.c.bf16 %v539, %v536
        %v562 = vpack.c.bf16 %v547, %v544
        %v563 = vpack.c.bf16 %v555, %v552
        %v564 = vld [vmem:[%s2] sm:$0xf]
        %v565 = vld [vmem:[%s2 + $0x4] sm:$0xf]
        %s566 = scalar_lea.vmem %s2, 8
        %v567 = vld [vmem:[%s566] sm:$0xf]
        %v568 = vld [vmem:[%s566 + $0x4] sm:$0xf]
        %v571 = vunpack.c.l.b16 %v567
        %v572 = vunpack.c.l.b16 %v568
        %v573 = vpack.c.b16 %v572, %v571
        %vm575 = vcmask 130048
        %v577 = vsel %vm575, %v560, 0
        %v580 = vsel %vm575, %v561, 0
        %582 = vmatprep.subr.bf16.mxu0 0
        %583 = vmatpush1.bf16.msra.mxu0 %v573
        %584 = vmatprep.subr.bf16.mxu0 0
        %585 = vmatpush1.bf16.msra.mxu0 0
        %586 = vmatprep.subr.bf16.mxu0 0
        %587 = vmatpush1.bf16.msra.mxu0 0
        %588 = vmatprep.subr.bf16.mxu0 0
        %589 = vmatpush1.bf16.msra.mxu0 0
        %590 = vmatprep.subr.bf16.mxu0 0
        %591 = vmatpush1.bf16.msra.mxu0 0
        %592 = vmatprep.subr.bf16.mxu0 0
        %593 = vmatpush1.bf16.msra.mxu0 0
        %594 = vmatprep.subr.bf16.mxu0 0
        %595 = vmatpush1.bf16.msra.mxu0 0
        %596 = vmatprep.subr.bf16.mxu0 0
        %597 = vmatpush1.bf16.msra.mxu0 0
        %598 = vmatprep.subr.bf16.mxu0 0
        %599 = vmatpush1.bf16.msra.mxu0 0
        %600 = vmatprep.subr.bf16.mxu0 0
        %601 = vmatpush1.bf16.msra.mxu0 0
        %602 = vmatprep.subr.bf16.mxu0 0
        %603 = vmatpush1.bf16.msra.mxu0 0
        %604 = vmatprep.subr.bf16.mxu0 0
        %605 = vmatpush1.bf16.msra.mxu0 0
        %606 = vmatprep.subr.bf16.mxu0 0
        %607 = vmatpush1.bf16.msra.mxu0 0
        %608 = vmatprep.subr.bf16.mxu0 0
        %609 = vmatpush1.bf16.msra.mxu0 0
        %610 = vmatprep.subr.bf16.mxu0 0
        %611 = vmatpush1.bf16.msra.mxu0 0
        %612 = vmatprep.subr.bf16.mxu0 0
        %613 = vmatpush1.bf16.msra.mxu0 0
        %614 = vmatprep.mubr.bf16.mxu0 0
        %615 = vmatmul.mubr.bf16.gmra.mrb[0].mxu0 %v577
        %v616 = vpop.f32.mrb[0].mxu0
        %v617 = vadd.f32 0.0, %v616
        %v618 = vpop.f32.mrb[0].mxu0
        %v619 = vpop.f32.mrb[0].mxu0
        %v620 = vadd.f32 0.0, %v619
        %v621 = vpop.f32.mrb[0].mxu0
        %622 = vmatprep.mubr.bf16.mxu0 0
        %623 = vmatmul.mubr.bf16.gmra.mrb[0].mxu0 %v580
        %v624 = vpop.f32.mrb[0].mxu0
        %v625 = vadd.f32 0.0, %v624
        %v626 = vpop.f32.mrb[0].mxu0
        %v627 = vpop.f32.mrb[0].mxu0
        %v628 = vadd.f32 0.0, %v627
        %v629 = vpop.f32.mrb[0].mxu0
        %630 = vdwg.mxu0
        %v633 = vunpack.c.l.b16 %v564
        %v634 = vunpack.c.l.b16 %v565
        %v635 = vpack.c.b16 %v634, %v633
        %v638 = vsel %vm575, %v558, 0
        %v641 = vsel %vm575, %v559, 0
        %643 = vmatprep.subr.bf16.mxu0 0
        %644 = vmatpush1.bf16.msra.mxu0 %v635
        %645 = vmatprep.subr.bf16.mxu0 0
        %646 = vmatpush1.bf16.msra.mxu0 0
        %647 = vmatprep.subr.bf16.mxu0 0
        %648 = vmatpush1.bf16.msra.mxu0 0
        %649 = vmatprep.subr.bf16.mxu0 0
        %650 = vmatpush1.bf16.msra.mxu0 0
        %651 = vmatprep.subr.bf16.mxu0 0
        %652 = vmatpush1.bf16.msra.mxu0 0
        %653 = vmatprep.subr.bf16.mxu0 0
        %654 = vmatpush1.bf16.msra.mxu0 0
        %655 = vmatprep.subr.bf16.mxu0 0
        %656 = vmatpush1.bf16.msra.mxu0 0
        %657 = vmatprep.subr.bf16.mxu0 0
        %658 = vmatpush1.bf16.msra.mxu0 0
        %659 = vmatprep.subr.bf16.mxu0 0
        %660 = vmatpush1.bf16.msra.mxu0 0
        %661 = vmatprep.subr.bf16.mxu0 0
        %662 = vmatpush1.bf16.msra.mxu0 0
        %663 = vmatprep.subr.bf16.mxu0 0
        %664 = vmatpush1.bf16.msra.mxu0 0
        %665 = vmatprep.subr.bf16.mxu0 0
        %666 = vmatpush1.bf16.msra.mxu0 0
        %667 = vmatprep.subr.bf16.mxu0 0
        %668 = vmatpush1.bf16.msra.mxu0 0
        %669 = vmatprep.subr.bf16.mxu0 0
        %670 = vmatpush1.bf16.msra.mxu0 0
        %671 = vmatprep.subr.bf16.mxu0 0
        %672 = vmatpush1.bf16.msra.mxu0 0
        %673 = vmatprep.subr.bf16.mxu0 0
        %674 = vmatpush1.bf16.msra.mxu0 0
        %675 = vmatprep.mubr.bf16.mxu0 0
        %676 = vmatmul.mubr.bf16.gmra.mrb[0].mxu0 %v638
        %v677 = vpop.f32.mrb[0].mxu0
        %v678 = vadd.f32 %v617, %v677
        %v679 = vpop.f32.mrb[0].mxu0
        %v680 = vpop.f32.mrb[0].mxu0
        %v681 = vadd.f32 %v620, %v680
        %v682 = vpop.f32.mrb[0].mxu0
        %683 = vmatprep.mubr.bf16.mxu0 0
        %684 = vmatmul.mubr.bf16.gmra.mrb[0].mxu0 %v641
        %v685 = vpop.f32.mrb[0].mxu0
        %v686 = vadd.f32 %v625, %v685
        %v687 = vpop.f32.mrb[0].mxu0
        %v688 = vpop.f32.mrb[0].mxu0
        %v689 = vadd.f32 %v628, %v688
        %v690 = vpop.f32.mrb[0].mxu0
        %691 = vdwg.mxu0
        %s692 = scalar_lea.vmem %s2, 16
        %v693 = vld [vmem:[%s692] sm:$0xf]
        %v694 = vld [vmem:[%s692 + $0x4] sm:$0xf]
        %v697 = vunpack.c.l.b16 %v693
        %v698 = vunpack.c.l.b16 %v694
        %v699 = vpack.c.b16 %v698, %v697
        %v702 = vsel %vm575, %v562, 0
        %v705 = vsel %vm575, %v563, 0
        %707 = vmatprep.subr.bf16.mxu0 0
        %708 = vmatpush1.bf16.msra.mxu0 %v699
        %709 = vmatprep.subr.bf16.mxu0 0
        %710 = vmatpush1.bf16.msra.mxu0 0
        %711 = vmatprep.subr.bf16.mxu0 0
        %712 = vmatpush1.bf16.msra.mxu0 0
        %713 = vmatprep.subr.bf16.mxu0 0
        %714 = vmatpush1.bf16.msra.mxu0 0
        %715 = vmatprep.subr.bf16.mxu0 0
        %716 = vmatpush1.bf16.msra.mxu0 0
        %717 = vmatprep.subr.bf16.mxu0 0
        %718 = vmatpush1.bf16.msra.mxu0 0
        %719 = vmatprep.subr.bf16.mxu0 0
        %720 = vmatpush1.bf16.msra.mxu0 0
        %721 = vmatprep.subr.bf16.mxu0 0
        %722 = vmatpush1.bf16.msra.mxu0 0
        %723 = vmatprep.subr.bf16.mxu0 0
        %724 = vmatpush1.bf16.msra.mxu0 0
        %725 = vmatprep.subr.bf16.mxu0 0
        %726 = vmatpush1.bf16.msra.mxu0 0
        %727 = vmatprep.subr.bf16.mxu0 0
        %728 = vmatpush1.bf16.msra.mxu0 0
        %729 = vmatprep.subr.bf16.mxu0 0
        %730 = vmatpush1.bf16.msra.mxu0 0
        %731 = vmatprep.subr.bf16.mxu0 0
        %732 = vmatpush1.bf16.msra.mxu0 0
        %733 = vmatprep.subr.bf16.mxu0 0
        %734 = vmatpush1.bf16.msra.mxu0 0
        %735 = vmatprep.subr.bf16.mxu0 0
        %736 = vmatpush1.bf16.msra.mxu0 0
        %737 = vmatprep.subr.bf16.mxu0 0
        %738 = vmatpush1.bf16.msra.mxu0 0
        %739 = vmatprep.mubr.bf16.mxu0 0
        %740 = vmatmul.mubr.bf16.gmra.mrb[0].mxu0 %v702
        %v741 = vpop.f32.mrb[0].mxu0
        %v742 = vadd.f32 0.0, %v741
        %v743 = vpop.f32.mrb[0].mxu0
        %v744 = vpop.f32.mrb[0].mxu0
        %v745 = vadd.f32 0.0, %v744
        %v746 = vpop.f32.mrb[0].mxu0
        %747 = vmatprep.mubr.bf16.mxu0 0
        %748 = vmatmul.mubr.bf16.gmra.mrb[0].mxu0 %v705
        %v749 = vpop.f32.mrb[0].mxu0
        %v750 = vadd.f32 0.0, %v749
        %v751 = vpop.f32.mrb[0].mxu0
        %v752 = vpop.f32.mrb[0].mxu0
        %v753 = vadd.f32 0.0, %v752
        %v754 = vpop.f32.mrb[0].mxu0
        %755 = vdwg.mxu0
        %v756 = vadd.f32 %v678, %v742
        %v757 = vadd.f32 %v681, %v745
        %v758 = vadd.f32 %v686, %v750
        %v759 = vadd.f32 %v689, %v753
        %v760 = vlaneseq
        %v761 = vshrl.u32 %v760, 7
        %v762 = vsub.s32 0, %v761
        %v763 = vrot.slane %v386, %v762
        %v764 = vmul.f32 %v756, %v763
        %v765 = vmul.f32 %v757, %v763
        %v766 = vmul.f32 %v758, %v763
        %v767 = vmul.f32 %v759, %v763
        %v768 = vlaneseq
        %v769 = vshrl.u32 %v768, 7
        %v770 = vsub.s32 1, %v769
        %v771 = vrot.slane %v386, %v770
        %v772 = vadd.f32 %v764, %v771
        %v773 = vadd.f32 %v765, %v771
        %v774 = vadd.f32 %v766, %v771
        %v775 = vadd.f32 %v767, %v771
        %vm776 = vcmp.ge.f32.partialorder %v772, 0.0
        %vm777 = vcmp.ge.f32.partialorder %v773, 0.0
        %vm778 = vcmp.ge.f32.partialorder %v774, 0.0
        %vm779 = vcmp.ge.f32.partialorder %v775, 0.0
        %v780 = vlaneseq
        %v781 = vshrl.u32 %v780, 7
        %v782 = vsub.s32 2, %v781
        %v783 = vrot.slane %v386, %v782
        %v784 = vmul.f32 %v783, %v772
        %v785 = vmul.f32 %v783, %v773
        %v786 = vmul.f32 %v783, %v774
        %v787 = vmul.f32 %v783, %v775
        %v788 = vsel %vm776, %v772, %v784
        %v789 = vsel %vm777, %v773, %v785
        %v790 = vsel %vm778, %v774, %v786
        %v791 = vsel %vm779, %v775, %v787
        %v792 = vld [vmem:[%s3] sm:$0xf]
        %v793 = vld [vmem:[%s3 + $0x4] sm:$0xf]
        %v794 = vld [vmem:[%s3 + $0x8] sm:$0xf]
        %v795 = vld [vmem:[%s3 + $0xc] sm:$0xf]
        %v796 = vld [vmem:[%s3 + $0x10] sm:$0xf]
        %v797 = vld [vmem:[%s3 + $0x14] sm:$0xf]
        %v798 = vld [vmem:[%s3 + $0x18] sm:$0xf]
        %v799 = vld [vmem:[%s3 + $0x1c] sm:$0xf]
        %v800 = vld [vmem:[%s3 + $0x20] sm:$0xf]
        %v801 = vld [vmem:[%s3 + $0x24] sm:$0xf]
        %v802 = vld [vmem:[%s3 + $0x28] sm:$0xf]
        %v803 = vld [vmem:[%s3 + $0x2c] sm:$0xf]
        %v804 = vpack.c.bf16 %v789, %v788
        %v805 = vpack.c.bf16 %v791, %v790
        %v818 = vunpack.c.l.b16 %v792
        %v819 = vunpack.c.l.b16 %v793
        %v820 = vunpack.c.l.b16 %v794
        %v821 = vunpack.c.l.b16 %v795
        %v822 = vunpack.c.l.b16 %v796
        %v823 = vunpack.c.l.b16 %v797
        %v824 = vunpack.c.l.b16 %v798
        %v825 = vunpack.c.l.b16 %v799
        %v826 = vunpack.c.l.b16 %v800
        %v827 = vunpack.c.l.b16 %v801
        %v828 = vunpack.c.l.b16 %v802
        %v829 = vunpack.c.l.b16 %v803
        %v830 = vpack.c.b16 %v819, %v818
        %v831 = vpack.c.b16 %v821, %v820
        %v832 = vpack.c.b16 %v823, %v822
        %v833 = vpack.c.b16 %v825, %v824
        %v834 = vpack.c.b16 %v827, %v826
        %v835 = vpack.c.b16 %v829, %v828
        %vm836 = vcmask 261120
        %v838 = vsel %vm836, %v830, 0
        %v841 = vsel %vm836, %v831, 0
        %v844 = vsel %vm836, %v832, 0
        %v847 = vsel %vm836, %v833, 0
        %v850 = vsel %vm836, %v834, 0
        %v853 = vsel %vm836, %v835, 0
        %855 = vmatprep.subr.bf16.mxu0 0
        %856 = vmatpush1.bf16.msra.mxu0 %v804
        %857 = vmatprep.subr.bf16.mxu0 0
        %858 = vmatpush1.bf16.msra.mxu0 %v805
        %859 = vmatprep.subr.bf16.mxu0 0
        %860 = vmatpush1.bf16.msra.mxu0 0
        %861 = vmatprep.subr.bf16.mxu0 0
        %862 = vmatpush1.bf16.msra.mxu0 0
        %863 = vmatprep.subr.bf16.mxu0 0
        %864 = vmatpush1.bf16.msra.mxu0 0
        %865 = vmatprep.subr.bf16.mxu0 0
        %866 = vmatpush1.bf16.msra.mxu0 0
        %867 = vmatprep.subr.bf16.mxu0 0
        %868 = vmatpush1.bf16.msra.mxu0 0
        %869 = vmatprep.subr.bf16.mxu0 0
        %870 = vmatpush1.bf16.msra.mxu0 0
        %871 = vmatprep.subr.bf16.mxu0 0
        %872 = vmatpush1.bf16.msra.mxu0 0
        %873 = vmatprep.subr.bf16.mxu0 0
        %874 = vmatpush1.bf16.msra.mxu0 0
        %875 = vmatprep.subr.bf16.mxu0 0
        %876 = vmatpush1.bf16.msra.mxu0 0
        %877 = vmatprep.subr.bf16.mxu0 0
        %878 = vmatpush1.bf16.msra.mxu0 0
        %879 = vmatprep.subr.bf16.mxu0 0
        %880 = vmatpush1.bf16.msra.mxu0 0
        %881 = vmatprep.subr.bf16.mxu0 0
        %882 = vmatpush1.bf16.msra.mxu0 0
        %883 = vmatprep.subr.bf16.mxu0 0
        %884 = vmatpush1.bf16.msra.mxu0 0
        %885 = vmatprep.subr.bf16.mxu0 0
        %886 = vmatpush1.bf16.msra.mxu0 0
        %887 = vmatprep.mubr.bf16.mxu0 0
        %888 = vmatmul.mubr.bf16.gmra.mrb[0].mxu0 %v838
        %v889 = vpop.f32.mrb[0].mxu0
        %v890 = vadd.f32 0.0, %v889
        %v891 = vpop.f32.mrb[0].mxu0
        %v892 = vpop.f32.mrb[0].mxu0
        %v893 = vadd.f32 0.0, %v892
        %v894 = vpop.f32.mrb[0].mxu0
        %895 = vmatprep.mubr.bf16.mxu0 0
        %896 = vmatmul.mubr.bf16.gmra.mrb[0].mxu0 %v841
        %v897 = vpop.f32.mrb[0].mxu0
        %v898 = vadd.f32 0.0, %v897
        %v899 = vpop.f32.mrb[0].mxu0
        %v900 = vpop.f32.mrb[0].mxu0
        %v901 = vadd.f32 0.0, %v900
        %v902 = vpop.f32.mrb[0].mxu0
        %903 = vmatprep.mubr.bf16.mxu0 0
        %904 = vmatmul.mubr.bf16.gmra.mrb[0].mxu0 %v844
        %v905 = vpop.f32.mrb[0].mxu0
        %v906 = vadd.f32 0.0, %v905
        %v907 = vpop.f32.mrb[0].mxu0
        %v908 = vpop.f32.mrb[0].mxu0
        %v909 = vadd.f32 0.0, %v908
        %v910 = vpop.f32.mrb[0].mxu0
        %911 = vmatprep.mubr.bf16.mxu0 0
        %912 = vmatmul.mubr.bf16.gmra.mrb[0].mxu0 %v847
        %v913 = vpop.f32.mrb[0].mxu0
        %v914 = vadd.f32 0.0, %v913
        %v915 = vpop.f32.mrb[0].mxu0
        %v916 = vpop.f32.mrb[0].mxu0
        %v917 = vadd.f32 0.0, %v916
        %v918 = vpop.f32.mrb[0].mxu0
        %919 = vmatprep.mubr.bf16.mxu0 0
        %920 = vmatmul.mubr.bf16.gmra.mrb[0].mxu0 %v850
        %v921 = vpop.f32.mrb[0].mxu0
        %v922 = vadd.f32 0.0, %v921
        %v923 = vpop.f32.mrb[0].mxu0
        %v924 = vpop.f32.mrb[0].mxu0
        %v925 = vadd.f32 0.0, %v924
        %v926 = vpop.f32.mrb[0].mxu0
        %927 = vmatprep.mubr.bf16.mxu0 0
        %928 = vmatmul.mubr.bf16.gmra.mrb[0].mxu0 %v853
        %v929 = vpop.f32.mrb[0].mxu0
        %v930 = vadd.f32 0.0, %v929
        %v931 = vpop.f32.mrb[0].mxu0
        %v932 = vpop.f32.mrb[0].mxu0
        %v933 = vadd.f32 0.0, %v932
        %v934 = vpop.f32.mrb[0].mxu0
        %935 = vdwg.mxu0
        %v936 = vpack.c.bf16 %v893, %v890
        %v937 = vpack.c.bf16 %v901, %v898
        %v938 = vpack.c.bf16 %v909, %v906
        %v939 = vpack.c.bf16 %v917, %v914
        %v940 = vpack.c.bf16 %v925, %v922
        %v941 = vpack.c.bf16 %v933, %v930
        %v942 = vld [vmem:[%s4] sm:$0xf]
        %v943 = vld [vmem:[%s4 + $0x4] sm:$0xf]
        %v944 = vld [vmem:[%s4 + $0x8] sm:$0xf]
        %v945 = vld [vmem:[%s4 + $0xc] sm:$0xf]
        %v946 = vld [vmem:[%s4 + $0x10] sm:$0xf]
        %v947 = vld [vmem:[%s4 + $0x14] sm:$0xf]
        %v948 = vld [vmem:[%s4 + $0x18] sm:$0xf]
        %v949 = vld [vmem:[%s4 + $0x1c] sm:$0xf]
        %s950 = scalar_lea.vmem %s4, 32
        %v951 = vld [vmem:[%s950] sm:$0xf]
        %v952 = vld [vmem:[%s950 + $0x4] sm:$0xf]
        %v953 = vld [vmem:[%s950 + $0x8] sm:$0xf]
        %v954 = vld [vmem:[%s950 + $0xc] sm:$0xf]
        %v955 = vld [vmem:[%s950 + $0x10] sm:$0xf]
        %v956 = vld [vmem:[%s950 + $0x14] sm:$0xf]
        %v957 = vld [vmem:[%s950 + $0x18] sm:$0xf]
        %v958 = vld [vmem:[%s950 + $0x1c] sm:$0xf]
        %v967 = vunpack.c.l.b16 %v951
        %v968 = vunpack.c.l.b16 %v952
        %v969 = vunpack.c.l.b16 %v953
        %v970 = vunpack.c.l.b16 %v954
        %v971 = vunpack.c.l.b16 %v955
        %v972 = vunpack.c.l.b16 %v956
        %v973 = vunpack.c.l.b16 %v957
        %v974 = vunpack.c.l.b16 %v958
        %v975 = vpack.c.b16 %v968, %v967
        %v976 = vpack.c.b16 %v970, %v969
        %v977 = vpack.c.b16 %v972, %v971
        %v978 = vpack.c.b16 %v974, %v973
        %v984 = vsel %vm458, %v938, 0
        %v987 = vsel %vm458, %v939, 0
        %989 = vmatprep.subr.bf16.mxu0 0
        %990 = vmatpush1.bf16.msra.mxu0 %v975
        %991 = vmatprep.subr.bf16.mxu0 0
        %992 = vmatpush1.bf16.msra.mxu0 %v976
        %993 = vmatprep.subr.bf16.mxu0 0
        %994 = vmatpush1.bf16.msra.mxu0 %v977
        %995 = vmatprep.subr.bf16.mxu0 0
        %996 = vmatpush1.bf16.msra.mxu0 %v978
        %997 = vmatprep.subr.bf16.mxu0 0
        %998 = vmatpush1.bf16.msra.mxu0 0
        %999 = vmatprep.subr.bf16.mxu0 0
        %1000 = vmatpush1.bf16.msra.mxu0 0
        %1001 = vmatprep.subr.bf16.mxu0 0
        %1002 = vmatpush1.bf16.msra.mxu0 0
        %1003 = vmatprep.subr.bf16.mxu0 0
        %1004 = vmatpush1.bf16.msra.mxu0 0
        %1005 = vmatprep.subr.bf16.mxu0 0
        %1006 = vmatpush1.bf16.msra.mxu0 0
        %1007 = vmatprep.subr.bf16.mxu0 0
        %1008 = vmatpush1.bf16.msra.mxu0 0
        %1009 = vmatprep.subr.bf16.mxu0 0
        %1010 = vmatpush1.bf16.msra.mxu0 0
        %1011 = vmatprep.subr.bf16.mxu0 0
        %1012 = vmatpush1.bf16.msra.mxu0 0
        %1013 = vmatprep.subr.bf16.mxu0 0
        %1014 = vmatpush1.bf16.msra.mxu0 0
        %1015 = vmatprep.subr.bf16.mxu0 0
        %1016 = vmatpush1.bf16.msra.mxu0 0
        %1017 = vmatprep.subr.bf16.mxu0 0
        %1018 = vmatpush1.bf16.msra.mxu0 0
        %1019 = vmatprep.subr.bf16.mxu0 0
        %1020 = vmatpush1.bf16.msra.mxu0 0
        %1021 = vmatprep.mubr.bf16.mxu0 0
        %1022 = vmatmul.mubr.bf16.gmra.mrb[0].mxu0 %v984
        %v1023 = vpop.f32.mrb[0].mxu0
        %v1024 = vadd.f32 0.0, %v1023
        %v1025 = vpop.f32.mrb[0].mxu0
        %v1026 = vpop.f32.mrb[0].mxu0
        %v1027 = vadd.f32 0.0, %v1026
        %v1028 = vpop.f32.mrb[0].mxu0
        %1029 = vmatprep.mubr.bf16.mxu0 0
        %1030 = vmatmul.mubr.bf16.gmra.mrb[0].mxu0 %v987
        %v1031 = vpop.f32.mrb[0].mxu0
        %v1032 = vadd.f32 0.0, %v1031
        %v1033 = vpop.f32.mrb[0].mxu0
        %v1034 = vpop.f32.mrb[0].mxu0
        %v1035 = vadd.f32 0.0, %v1034
        %v1036 = vpop.f32.mrb[0].mxu0
        %1037 = vdwg.mxu0
        %v1046 = vunpack.c.l.b16 %v942
        %v1047 = vunpack.c.l.b16 %v943
        %v1048 = vunpack.c.l.b16 %v944
        %v1049 = vunpack.c.l.b16 %v945
        %v1050 = vunpack.c.l.b16 %v946
        %v1051 = vunpack.c.l.b16 %v947
        %v1052 = vunpack.c.l.b16 %v948
        %v1053 = vunpack.c.l.b16 %v949
        %v1054 = vpack.c.b16 %v1047, %v1046
        %v1055 = vpack.c.b16 %v1049, %v1048
        %v1056 = vpack.c.b16 %v1051, %v1050
        %v1057 = vpack.c.b16 %v1053, %v1052
        %v1063 = vsel %vm458, %v936, 0
        %v1066 = vsel %vm458, %v937, 0
        %1068 = vmatprep.subr.bf16.mxu0 0
        %1069 = vmatpush1.bf16.msra.mxu0 %v1054
        %1070 = vmatprep.subr.bf16.mxu0 0
        %1071 = vmatpush1.bf16.msra.mxu0 %v1055
        %1072 = vmatprep.subr.bf16.mxu0 0
        %1073 = vmatpush1.bf16.msra.mxu0 %v1056
        %1074 = vmatprep.subr.bf16.mxu0 0
        %1075 = vmatpush1.bf16.msra.mxu0 %v1057
        %1076 = vmatprep.subr.bf16.mxu0 0
        %1077 = vmatpush1.bf16.msra.mxu0 0
        %1078 = vmatprep.subr.bf16.mxu0 0
        %1079 = vmatpush1.bf16.msra.mxu0 0
        %1080 = vmatprep.subr.bf16.mxu0 0
        %1081 = vmatpush1.bf16.msra.mxu0 0
        %1082 = vmatprep.subr.bf16.mxu0 0
        %1083 = vmatpush1.bf16.msra.mxu0 0
        %1084 = vmatprep.subr.bf16.mxu0 0
        %1085 = vmatpush1.bf16.msra.mxu0 0
        %1086 = vmatprep.subr.bf16.mxu0 0
        %1087 = vmatpush1.bf16.msra.mxu0 0
        %1088 = vmatprep.subr.bf16.mxu0 0
        %1089 = vmatpush1.bf16.msra.mxu0 0
        %1090 = vmatprep.subr.bf16.mxu0 0
        %1091 = vmatpush1.bf16.msra.mxu0 0
        %1092 = vmatprep.subr.bf16.mxu0 0
        %1093 = vmatpush1.bf16.msra.mxu0 0
        %1094 = vmatprep.subr.bf16.mxu0 0
        %1095 = vmatpush1.bf16.msra.mxu0 0
        %1096 = vmatprep.subr.bf16.mxu0 0
        %1097 = vmatpush1.bf16.msra.mxu0 0
        %1098 = vmatprep.subr.bf16.mxu0 0
        %1099 = vmatpush1.bf16.msra.mxu0 0
        %1100 = vmatprep.mubr.bf16.mxu0 0
        %1101 = vmatmul.mubr.bf16.gmra.mrb[0].mxu0 %v1063
        %v1102 = vpop.f32.mrb[0].mxu0
        %v1103 = vadd.f32 %v1024, %v1102
        %v1104 = vpop.f32.mrb[0].mxu0
        %v1105 = vpop.f32.mrb[0].mxu0
        %v1106 = vadd.f32 %v1027, %v1105
        %v1107 = vpop.f32.mrb[0].mxu0
        %1108 = vmatprep.mubr.bf16.mxu0 0
        %1109 = vmatmul.mubr.bf16.gmra.mrb[0].mxu0 %v1066
        %v1110 = vpop.f32.mrb[0].mxu0
        %v1111 = vadd.f32 %v1032, %v1110
        %v1112 = vpop.f32.mrb[0].mxu0
        %v1113 = vpop.f32.mrb[0].mxu0
        %v1114 = vadd.f32 %v1035, %v1113
        %v1115 = vpop.f32.mrb[0].mxu0
        %1116 = vdwg.mxu0
        %s1117 = scalar_lea.vmem %s4, 64
        %v1118 = vld [vmem:[%s1117] sm:$0xf]
        %v1119 = vld [vmem:[%s1117 + $0x4] sm:$0xf]
        %v1120 = vld [vmem:[%s1117 + $0x8] sm:$0xf]
        %v1121 = vld [vmem:[%s1117 + $0xc] sm:$0xf]
        %v1122 = vld [vmem:[%s1117 + $0x10] sm:$0xf]
        %v1123 = vld [vmem:[%s1117 + $0x14] sm:$0xf]
        %v1124 = vld [vmem:[%s1117 + $0x18] sm:$0xf]
        %v1125 = vld [vmem:[%s1117 + $0x1c] sm:$0xf]
        %v1134 = vunpack.c.l.b16 %v1118
        %v1135 = vunpack.c.l.b16 %v1119
        %v1136 = vunpack.c.l.b16 %v1120
        %v1137 = vunpack.c.l.b16 %v1121
        %v1138 = vunpack.c.l.b16 %v1122
        %v1139 = vunpack.c.l.b16 %v1123
        %v1140 = vunpack.c.l.b16 %v1124
        %v1141 = vunpack.c.l.b16 %v1125
        %v1142 = vpack.c.b16 %v1135, %v1134
        %v1143 = vpack.c.b16 %v1137, %v1136
        %v1144 = vpack.c.b16 %v1139, %v1138
        %v1145 = vpack.c.b16 %v1141, %v1140
        %v1151 = vsel %vm458, %v940, 0
        %v1154 = vsel %vm458, %v941, 0
        %1156 = vmatprep.subr.bf16.mxu0 0
        %1157 = vmatpush1.bf16.msra.mxu0 %v1142
        %1158 = vmatprep.subr.bf16.mxu0 0
        %1159 = vmatpush1.bf16.msra.mxu0 %v1143
        %1160 = vmatprep.subr.bf16.mxu0 0
        %1161 = vmatpush1.bf16.msra.mxu0 %v1144
        %1162 = vmatprep.subr.bf16.mxu0 0
        %1163 = vmatpush1.bf16.msra.mxu0 %v1145
        %1164 = vmatprep.subr.bf16.mxu0 0
        %1165 = vmatpush1.bf16.msra.mxu0 0
        %1166 = vmatprep.subr.bf16.mxu0 0
        %1167 = vmatpush1.bf16.msra.mxu0 0
        %1168 = vmatprep.subr.bf16.mxu0 0
        %1169 = vmatpush1.bf16.msra.mxu0 0
        %1170 = vmatprep.subr.bf16.mxu0 0
        %1171 = vmatpush1.bf16.msra.mxu0 0
        %1172 = vmatprep.subr.bf16.mxu0 0
        %1173 = vmatpush1.bf16.msra.mxu0 0
        %1174 = vmatprep.subr.bf16.mxu0 0
        %1175 = vmatpush1.bf16.msra.mxu0 0
        %1176 = vmatprep.subr.bf16.mxu0 0
        %1177 = vmatpush1.bf16.msra.mxu0 0
        %1178 = vmatprep.subr.bf16.mxu0 0
        %1179 = vmatpush1.bf16.msra.mxu0 0
        %1180 = vmatprep.subr.bf16.mxu0 0
        %1181 = vmatpush1.bf16.msra.mxu0 0
        %1182 = vmatprep.subr.bf16.mxu0 0
        %1183 = vmatpush1.bf16.msra.mxu0 0
        %1184 = vmatprep.subr.bf16.mxu0 0
        %1185 = vmatpush1.bf16.msra.mxu0 0
        %1186 = vmatprep.subr.bf16.mxu0 0
        %1187 = vmatpush1.bf16.msra.mxu0 0
        %1188 = vmatprep.mubr.bf16.mxu0 0
        %1189 = vmatmul.mubr.bf16.gmra.mrb[0].mxu0 %v1151
        %v1190 = vpop.f32.mrb[0].mxu0
        %v1191 = vadd.f32 0.0, %v1190
        %v1192 = vpop.f32.mrb[0].mxu0
        %v1193 = vpop.f32.mrb[0].mxu0
        %v1194 = vadd.f32 0.0, %v1193
        %v1195 = vpop.f32.mrb[0].mxu0
        %1196 = vmatprep.mubr.bf16.mxu0 0
        %1197 = vmatmul.mubr.bf16.gmra.mrb[0].mxu0 %v1154
        %v1198 = vpop.f32.mrb[0].mxu0
        %v1199 = vadd.f32 0.0, %v1198
        %v1200 = vpop.f32.mrb[0].mxu0
        %v1201 = vpop.f32.mrb[0].mxu0
        %v1202 = vadd.f32 0.0, %v1201
        %v1203 = vpop.f32.mrb[0].mxu0
        %1204 = vdwg.mxu0
        %v1205 = vadd.f32 %v1103, %v1191
        %v1206 = vadd.f32 %v1106, %v1194
        %v1207 = vadd.f32 %v1111, %v1199
        %v1208 = vadd.f32 %v1114, %v1202
        %v1209 = vlaneseq
        %v1210 = vshrl.u32 %v1209, 7
        %v1211 = vsub.s32 3, %v1210
        %v1212 = vrot.slane %v386, %v1211
        %v1213 = vmul.f32 %v1205, %v1212
        %v1214 = vmul.f32 %v1206, %v1212
        %v1215 = vmul.f32 %v1207, %v1212
        %v1216 = vmul.f32 %v1208, %v1212
        %v1217 = vlaneseq
        %v1218 = vshrl.u32 %v1217, 7
        %v1219 = vsub.s32 4, %v1218
        %v1220 = vrot.slane %v386, %v1219
        %v1221 = vadd.f32 %v1213, %v1220
        %v1222 = vadd.f32 %v1214, %v1220
        %v1223 = vadd.f32 %v1215, %v1220
        %v1224 = vadd.f32 %v1216, %v1220
        %vm1225 = vcmp.ge.f32.partialorder %v1221, 0.0
        %vm1226 = vcmp.ge.f32.partialorder %v1222, 0.0
        %vm1227 = vcmp.ge.f32.partialorder %v1223, 0.0
        %vm1228 = vcmp.ge.f32.partialorder %v1224, 0.0
        %v1229 = vlaneseq
        %v1230 = vshrl.u32 %v1229, 7
        %v1231 = vsub.s32 5, %v1230
        %v1232 = vrot.slane %v386, %v1231
        %v1233 = vmul.f32 %v1232, %v1221
        %v1234 = vmul.f32 %v1232, %v1222
        %v1235 = vmul.f32 %v1232, %v1223
        %v1236 = vmul.f32 %v1232, %v1224
        %v1237 = vsel %vm1225, %v1221, %v1233
        %v1238 = vsel %vm1226, %v1222, %v1234
        %v1239 = vsel %vm1227, %v1223, %v1235
        %v1240 = vsel %vm1228, %v1224, %v1236
        %v1241 = vadd.f32 %v1237, %v788
        %v1242 = vadd.f32 %v1238, %v789
        %v1243 = vadd.f32 %v1239, %v790
        %v1244 = vadd.f32 %v1240, %v791
        %v1245 = vld [vmem:[%s5] sm:$0xf]
        %v1246 = vld [vmem:[%s5 + $0x4] sm:$0xf]
        %v1247 = vld [vmem:[%s5 + $0x8] sm:$0xf]
        %v1248 = vld [vmem:[%s5 + $0xc] sm:$0xf]
        %v1249 = vld [vmem:[%s5 + $0x10] sm:$0xf]
        %v1250 = vld [vmem:[%s5 + $0x14] sm:$0xf]
        %v1251 = vpack.c.bf16 %v1242, %v1241
        %v1252 = vpack.c.bf16 %v1244, %v1243
        %v1259 = vunpack.c.l.b16 %v1245
        %v1260 = vunpack.c.l.b16 %v1246
        %v1261 = vunpack.c.l.b16 %v1247
        %v1262 = vunpack.c.l.b16 %v1248
        %v1263 = vunpack.c.l.b16 %v1249
        %v1264 = vunpack.c.l.b16 %v1250
        %v1265 = vpack.c.b16 %v1260, %v1259
        %v1266 = vpack.c.b16 %v1262, %v1261
        %v1267 = vpack.c.b16 %v1264, %v1263
        %v1269 = vsel %vm836, %v1265, 0
        %v1272 = vsel %vm836, %v1266, 0
        %v1275 = vsel %vm836, %v1267, 0
        %1277 = vmatprep.subr.bf16.mxu0 0
        %1278 = vmatpush1.bf16.msra.mxu0 %v1251
        %1279 = vmatprep.subr.bf16.mxu0 0
        %1280 = vmatpush1.bf16.msra.mxu0 %v1252
        %1281 = vmatprep.subr.bf16.mxu0 0
        %1282 = vmatpush1.bf16.msra.mxu0 0
        %1283 = vmatprep.subr.bf16.mxu0 0
        %1284 = vmatpush1.bf16.msra.mxu0 0
        %1285 = vmatprep.subr.bf16.mxu0 0
        %1286 = vmatpush1.bf16.msra.mxu0 0
        %1287 = vmatprep.subr.bf16.mxu0 0
        %1288 = vmatpush1.bf16.msra.mxu0 0
        %1289 = vmatprep.subr.bf16.mxu0 0
        %1290 = vmatpush1.bf16.msra.mxu0 0
        %1291 = vmatprep.subr.bf16.mxu0 0
        %1292 = vmatpush1.bf16.msra.mxu0 0
        %1293 = vmatprep.subr.bf16.mxu0 0
        %1294 = vmatpush1.bf16.msra.mxu0 0
        %1295 = vmatprep.subr.bf16.mxu0 0
        %1296 = vmatpush1.bf16.msra.mxu0 0
        %1297 = vmatprep.subr.bf16.mxu0 0
        %1298 = vmatpush1.bf16.msra.mxu0 0
        %1299 = vmatprep.subr.bf16.mxu0 0
        %1300 = vmatpush1.bf16.msra.mxu0 0
        %1301 = vmatprep.subr.bf16.mxu0 0
        %1302 = vmatpush1.bf16.msra.mxu0 0
        %1303 = vmatprep.subr.bf16.mxu0 0
        %1304 = vmatpush1.bf16.msra.mxu0 0
        %1305 = vmatprep.subr.bf16.mxu0 0
        %1306 = vmatpush1.bf16.msra.mxu0 0
        %1307 = vmatprep.subr.bf16.mxu0 0
        %1308 = vmatpush1.bf16.msra.mxu0 0
        %1309 = vmatprep.mubr.bf16.mxu0 0
        %1310 = vmatmul.mubr.bf16.gmra.mrb[0].mxu0 %v1269
        %v1311 = vpop.f32.mrb[0].mxu0
        %v1312 = vadd.f32 0.0, %v1311
        %v1313 = vpop.f32.mrb[0].mxu0
        %v1314 = vpop.f32.mrb[0].mxu0
        %v1315 = vadd.f32 0.0, %v1314
        %v1316 = vpop.f32.mrb[0].mxu0
        %1317 = vmatprep.mubr.bf16.mxu0 0
        %1318 = vmatmul.mubr.bf16.gmra.mrb[0].mxu0 %v1272
        %v1319 = vpop.f32.mrb[0].mxu0
        %v1320 = vadd.f32 0.0, %v1319
        %v1321 = vpop.f32.mrb[0].mxu0
        %v1322 = vpop.f32.mrb[0].mxu0
        %v1323 = vadd.f32 0.0, %v1322
        %v1324 = vpop.f32.mrb[0].mxu0
        %1325 = vmatprep.mubr.bf16.mxu0 0
        %1326 = vmatmul.mubr.bf16.gmra.mrb[0].mxu0 %v1275
        %v1327 = vpop.f32.mrb[0].mxu0
        %v1328 = vadd.f32 0.0, %v1327
        %v1329 = vpop.f32.mrb[0].mxu0
        %v1330 = vpop.f32.mrb[0].mxu0
        %v1331 = vadd.f32 0.0, %v1330
        %v1332 = vpop.f32.mrb[0].mxu0
        %1333 = vdwg.mxu0
        %v1334 = vpack.c.bf16 %v1315, %v1312
        %v1335 = vpack.c.bf16 %v1323, %v1320
        %v1336 = vpack.c.bf16 %v1331, %v1328
        %v1337 = vld [vmem:[%s6] sm:$0xf]
        %v1338 = vld [vmem:[%s6 + $0x4] sm:$0xf]
        %v1339 = vld [vmem:[%s6 + $0x8] sm:$0xf]
        %v1340 = vld [vmem:[%s6 + $0xc] sm:$0xf]
        %v1341 = vld [vmem:[%s6 + $0x10] sm:$0xf]
        %v1342 = vld [vmem:[%s6 + $0x14] sm:$0xf]
        %v1343 = vld [vmem:[%s6 + $0x18] sm:$0xf]
        %v1344 = vld [vmem:[%s6 + $0x1c] sm:$0xf]
        %s1345 = scalar_lea.vmem %s6, 32
        %v1346 = vld [vmem:[%s1345] sm:$0xf]
        %v1347 = vld [vmem:[%s1345 + $0x4] sm:$0xf]
        %v1348 = vld [vmem:[%s1345 + $0x8] sm:$0xf]
        %v1349 = vld [vmem:[%s1345 + $0xc] sm:$0xf]
        %v1350 = vld [vmem:[%s1345 + $0x10] sm:$0xf]
        %v1351 = vld [vmem:[%s1345 + $0x14] sm:$0xf]
        %v1352 = vld [vmem:[%s1345 + $0x18] sm:$0xf]
        %v1353 = vld [vmem:[%s1345 + $0x1c] sm:$0xf]
        %v1362 = vunpack.c.l.b16 %v1346
        %v1363 = vunpack.c.l.b16 %v1347
        %v1364 = vunpack.c.l.b16 %v1348
        %v1365 = vunpack.c.l.b16 %v1349
        %v1366 = vunpack.c.l.b16 %v1350
        %v1367 = vunpack.c.l.b16 %v1351
        %v1368 = vunpack.c.l.b16 %v1352
        %v1369 = vunpack.c.l.b16 %v1353
        %v1370 = vpack.c.b16 %v1363, %v1362
        %v1371 = vpack.c.b16 %v1365, %v1364
        %v1372 = vpack.c.b16 %v1367, %v1366
        %v1373 = vpack.c.b16 %v1369, %v1368
        %v1379 = vsel %vm458, %v1335, 0
        %1381 = vmatprep.subr.bf16.mxu0 0
        %1382 = vmatpush1.bf16.msra.mxu0 %v1370
        %1383 = vmatprep.subr.bf16.mxu0 0
        %1384 = vmatpush1.bf16.msra.mxu0 %v1371
        %1385 = vmatprep.subr.bf16.mxu0 0
        %1386 = vmatpush1.bf16.msra.mxu0 %v1372
        %1387 = vmatprep.subr.bf16.mxu0 0
        %1388 = vmatpush1.bf16.msra.mxu0 %v1373
        %1389 = vmatprep.subr.bf16.mxu0 0
        %1390 = vmatpush1.bf16.msra.mxu0 0
        %1391 = vmatprep.subr.bf16.mxu0 0
        %1392 = vmatpush1.bf16.msra.mxu0 0
        %1393 = vmatprep.subr.bf16.mxu0 0
        %1394 = vmatpush1.bf16.msra.mxu0 0
        %1395 = vmatprep.subr.bf16.mxu0 0
        %1396 = vmatpush1.bf16.msra.mxu0 0
        %1397 = vmatprep.subr.bf16.mxu0 0
        %1398 = vmatpush1.bf16.msra.mxu0 0
        %1399 = vmatprep.subr.bf16.mxu0 0
        %1400 = vmatpush1.bf16.msra.mxu0 0
        %1401 = vmatprep.subr.bf16.mxu0 0
        %1402 = vmatpush1.bf16.msra.mxu0 0
        %1403 = vmatprep.subr.bf16.mxu0 0
        %1404 = vmatpush1.bf16.msra.mxu0 0
        %1405 = vmatprep.subr.bf16.mxu0 0
        %1406 = vmatpush1.bf16.msra.mxu0 0
        %1407 = vmatprep.subr.bf16.mxu0 0
        %1408 = vmatpush1.bf16.msra.mxu0 0
        %1409 = vmatprep.subr.bf16.mxu0 0
        %1410 = vmatpush1.bf16.msra.mxu0 0
        %1411 = vmatprep.subr.bf16.mxu0 0
        %1412 = vmatpush1.bf16.msra.mxu0 0
        %1413 = vmatprep.mubr.bf16.mxu0 0
        %1414 = vmatmul.mubr.bf16.gmra.mrb[0].mxu0 %v1379
        %v1415 = vpop.f32.mrb[0].mxu0
        %v1416 = vadd.f32 0.0, %v1415
        %v1417 = vpop.f32.mrb[0].mxu0
        %v1418 = vpop.f32.mrb[0].mxu0
        %v1419 = vadd.f32 0.0, %v1418
        %v1420 = vpop.f32.mrb[0].mxu0
        %1421 = vdwg.mxu0
        %v1430 = vunpack.c.l.b16 %v1337
        %v1431 = vunpack.c.l.b16 %v1338
        %v1432 = vunpack.c.l.b16 %v1339
        %v1433 = vunpack.c.l.b16 %v1340
        %v1434 = vunpack.c.l.b16 %v1341
        %v1435 = vunpack.c.l.b16 %v1342
        %v1436 = vunpack.c.l.b16 %v1343
        %v1437 = vunpack.c.l.b16 %v1344
        %v1438 = vpack.c.b16 %v1431, %v1430
        %v1439 = vpack.c.b16 %v1433, %v1432
        %v1440 = vpack.c.b16 %v1435, %v1434
        %v1441 = vpack.c.b16 %v1437, %v1436
        %v1447 = vsel %vm458, %v1334, 0
        %1449 = vmatprep.subr.bf16.mxu0 0
        %1450 = vmatpush1.bf16.msra.mxu0 %v1438
        %1451 = vmatprep.subr.bf16.mxu0 0
        %1452 = vmatpush1.bf16.msra.mxu0 %v1439
        %1453 = vmatprep.subr.bf16.mxu0 0
        %1454 = vmatpush1.bf16.msra.mxu0 %v1440
        %1455 = vmatprep.subr.bf16.mxu0 0
        %1456 = vmatpush1.bf16.msra.mxu0 %v1441
        %1457 = vmatprep.subr.bf16.mxu0 0
        %1458 = vmatpush1.bf16.msra.mxu0 0
        %1459 = vmatprep.subr.bf16.mxu0 0
        %1460 = vmatpush1.bf16.msra.mxu0 0
        %1461 = vmatprep.subr.bf16.mxu0 0
        %1462 = vmatpush1.bf16.msra.mxu0 0
        %1463 = vmatprep.subr.bf16.mxu0 0
        %1464 = vmatpush1.bf16.msra.mxu0 0
        %1465 = vmatprep.subr.bf16.mxu0 0
        %1466 = vmatpush1.bf16.msra.mxu0 0
        %1467 = vmatprep.subr.bf16.mxu0 0
        %1468 = vmatpush1.bf16.msra.mxu0 0
        %1469 = vmatprep.subr.bf16.mxu0 0
        %1470 = vmatpush1.bf16.msra.mxu0 0
        %1471 = vmatprep.subr.bf16.mxu0 0
        %1472 = vmatpush1.bf16.msra.mxu0 0
        %1473 = vmatprep.subr.bf16.mxu0 0
        %1474 = vmatpush1.bf16.msra.mxu0 0
        %1475 = vmatprep.subr.bf16.mxu0 0
        %1476 = vmatpush1.bf16.msra.mxu0 0
        %1477 = vmatprep.subr.bf16.mxu0 0
        %1478 = vmatpush1.bf16.msra.mxu0 0
        %1479 = vmatprep.subr.bf16.mxu0 0
        %1480 = vmatpush1.bf16.msra.mxu0 0
        %1481 = vmatprep.mubr.bf16.mxu0 0
        %1482 = vmatmul.mubr.bf16.gmra.mrb[0].mxu0 %v1447
        %v1483 = vpop.f32.mrb[0].mxu0
        %v1484 = vadd.f32 %v1416, %v1483
        %v1485 = vpop.f32.mrb[0].mxu0
        %v1486 = vpop.f32.mrb[0].mxu0
        %v1487 = vadd.f32 %v1419, %v1486
        %v1488 = vpop.f32.mrb[0].mxu0
        %1489 = vdwg.mxu0
        %s1490 = scalar_lea.vmem %s6, 64
        %v1491 = vld [vmem:[%s1490] sm:$0xf]
        %v1492 = vld [vmem:[%s1490 + $0x4] sm:$0xf]
        %v1493 = vld [vmem:[%s1490 + $0x8] sm:$0xf]
        %v1494 = vld [vmem:[%s1490 + $0xc] sm:$0xf]
        %v1495 = vld [vmem:[%s1490 + $0x10] sm:$0xf]
        %v1496 = vld [vmem:[%s1490 + $0x14] sm:$0xf]
        %v1497 = vld [vmem:[%s1490 + $0x18] sm:$0xf]
        %v1498 = vld [vmem:[%s1490 + $0x1c] sm:$0xf]
        %v1507 = vunpack.c.l.b16 %v1491
        %v1508 = vunpack.c.l.b16 %v1492
        %v1509 = vunpack.c.l.b16 %v1493
        %v1510 = vunpack.c.l.b16 %v1494
        %v1511 = vunpack.c.l.b16 %v1495
        %v1512 = vunpack.c.l.b16 %v1496
        %v1513 = vunpack.c.l.b16 %v1497
        %v1514 = vunpack.c.l.b16 %v1498
        %v1515 = vpack.c.b16 %v1508, %v1507
        %v1516 = vpack.c.b16 %v1510, %v1509
        %v1517 = vpack.c.b16 %v1512, %v1511
        %v1518 = vpack.c.b16 %v1514, %v1513
        %v1524 = vsel %vm458, %v1336, 0
        %1526 = vmatprep.subr.bf16.mxu0 0
        %1527 = vmatpush1.bf16.msra.mxu0 %v1515
        %1528 = vmatprep.subr.bf16.mxu0 0
        %1529 = vmatpush1.bf16.msra.mxu0 %v1516
        %1530 = vmatprep.subr.bf16.mxu0 0
        %1531 = vmatpush1.bf16.msra.mxu0 %v1517
        %1532 = vmatprep.subr.bf16.mxu0 0
        %1533 = vmatpush1.bf16.msra.mxu0 %v1518
        %1534 = vmatprep.subr.bf16.mxu0 0
        %1535 = vmatpush1.bf16.msra.mxu0 0
        %1536 = vmatprep.subr.bf16.mxu0 0
        %1537 = vmatpush1.bf16.msra.mxu0 0
        %1538 = vmatprep.subr.bf16.mxu0 0
        %1539 = vmatpush1.bf16.msra.mxu0 0
        %1540 = vmatprep.subr.bf16.mxu0 0
        %1541 = vmatpush1.bf16.msra.mxu0 0
        %1542 = vmatprep.subr.bf16.mxu0 0
        %1543 = vmatpush1.bf16.msra.mxu0 0
        %1544 = vmatprep.subr.bf16.mxu0 0
        %1545 = vmatpush1.bf16.msra.mxu0 0
        %1546 = vmatprep.subr.bf16.mxu0 0
        %1547 = vmatpush1.bf16.msra.mxu0 0
        %1548 = vmatprep.subr.bf16.mxu0 0
        %1549 = vmatpush1.bf16.msra.mxu0 0
        %1550 = vmatprep.subr.bf16.mxu0 0
        %1551 = vmatpush1.bf16.msra.mxu0 0
        %1552 = vmatprep.subr.bf16.mxu0 0
        %1553 = vmatpush1.bf16.msra.mxu0 0
        %1554 = vmatprep.subr.bf16.mxu0 0
        %1555 = vmatpush1.bf16.msra.mxu0 0
        %1556 = vmatprep.subr.bf16.mxu0 0
        %1557 = vmatpush1.bf16.msra.mxu0 0
        %1558 = vmatprep.mubr.bf16.mxu0 0
        %1559 = vmatmul.mubr.bf16.gmra.mrb[0].mxu0 %v1524
        %v1560 = vpop.f32.mrb[0].mxu0
        %v1561 = vadd.f32 0.0, %v1560
        %v1562 = vpop.f32.mrb[0].mxu0
        %v1563 = vpop.f32.mrb[0].mxu0
        %v1564 = vadd.f32 0.0, %v1563
        %v1565 = vpop.f32.mrb[0].mxu0
        %1566 = vdwg.mxu0
        %v1567 = vadd.f32 %v1484, %v1561
        %v1568 = vadd.f32 %v1487, %v1564
        %v1569 = vlaneseq
        %v1570 = vshrl.u32 %v1569, 7
        %v1571 = vsub.s32 6, %v1570
        %v1572 = vrot.slane %v386, %v1571
        %v1573 = vmul.f32 %v1567, %v1572
        %v1574 = vmul.f32 %v1568, %v1572
        %v1575 = vlaneseq
        %v1576 = vshrl.u32 %v1575, 7
        %v1577 = vsub.s32 7, %v1576
        %v1578 = vrot.slane %v386, %v1577
        %v1579 = vadd.f32 %v1573, %v1578
        %v1580 = vadd.f32 %v1574, %v1578
        %vm1581 = vcmp.ge.f32.partialorder %v1579, 0.0
        %vm1582 = vcmp.ge.f32.partialorder %v1580, 0.0
        %v1583 = vlaneseq
        %v1584 = vshrl.u32 %v1583, 7
        %v1585 = vsub.s32 0, %v1584
        %v1586 = vrot.slane %v387, %v1585
        %v1587 = vmul.f32 %v1586, %v1579
        %v1588 = vmul.f32 %v1586, %v1580
        %v1589 = vsel %vm1581, %v1579, %v1587
        %v1590 = vsel %vm1582, %v1580, %v1588
        %v1591 = vld [vmem:[%s7] sm:$0xf]
        %v1592 = vld [vmem:[%s7 + $0x4] sm:$0xf]
        %v1593 = vld [vmem:[%s7 + $0x8] sm:$0xf]
        %v1594 = vld [vmem:[%s7 + $0xc] sm:$0xf]
        %v1595 = vld [vmem:[%s7 + $0x10] sm:$0xf]
        %v1596 = vld [vmem:[%s7 + $0x14] sm:$0xf]
        %v1597 = vpack.c.bf16 %v1590, %v1589
        %v1604 = vunpack.c.l.b16 %v1591
        %v1605 = vunpack.c.l.b16 %v1592
        %v1606 = vunpack.c.l.b16 %v1593
        %v1607 = vunpack.c.l.b16 %v1594
        %v1608 = vunpack.c.l.b16 %v1595
        %v1609 = vunpack.c.l.b16 %v1596
        %v1610 = vpack.c.b16 %v1605, %v1604
        %v1611 = vpack.c.b16 %v1607, %v1606
        %v1612 = vpack.c.b16 %v1609, %v1608
        %v1614 = vsel %vm575, %v1610, 0
        %v1617 = vsel %vm575, %v1611, 0
        %v1620 = vsel %vm575, %v1612, 0
        %1622 = vmatprep.subr.bf16.mxu0 0
        %1623 = vmatpush1.bf16.msra.mxu0 %v1597
        %1624 = vmatprep.subr.bf16.mxu0 0
        %1625 = vmatpush1.bf16.msra.mxu0 0
        %1626 = vmatprep.subr.bf16.mxu0 0
        %1627 = vmatpush1.bf16.msra.mxu0 0
        %1628 = vmatprep.subr.bf16.mxu0 0
        %1629 = vmatpush1.bf16.msra.mxu0 0
        %1630 = vmatprep.subr.bf16.mxu0 0
        %1631 = vmatpush1.bf16.msra.mxu0 0
        %1632 = vmatprep.subr.bf16.mxu0 0
        %1633 = vmatpush1.bf16.msra.mxu0 0
        %1634 = vmatprep.subr.bf16.mxu0 0
        %1635 = vmatpush1.bf16.msra.mxu0 0
        %1636 = vmatprep.subr.bf16.mxu0 0
        %1637 = vmatpush1.bf16.msra.mxu0 0
        %1638 = vmatprep.subr.bf16.mxu0 0
        %1639 = vmatpush1.bf16.msra.mxu0 0
        %1640 = vmatprep.subr.bf16.mxu0 0
        %1641 = vmatpush1.bf16.msra.mxu0 0
        %1642 = vmatprep.subr.bf16.mxu0 0
        %1643 = vmatpush1.bf16.msra.mxu0 0
        %1644 = vmatprep.subr.bf16.mxu0 0
        %1645 = vmatpush1.bf16.msra.mxu0 0
        %1646 = vmatprep.subr.bf16.mxu0 0
        %1647 = vmatpush1.bf16.msra.mxu0 0
        %1648 = vmatprep.subr.bf16.mxu0 0
        %1649 = vmatpush1.bf16.msra.mxu0 0
        %1650 = vmatprep.subr.bf16.mxu0 0
        %1651 = vmatpush1.bf16.msra.mxu0 0
        %1652 = vmatprep.subr.bf16.mxu0 0
        %1653 = vmatpush1.bf16.msra.mxu0 0
        %1654 = vmatprep.mubr.bf16.mxu0 0
        %1655 = vmatmul.mubr.bf16.gmra.mrb[0].mxu0 %v1614
        %v1656 = vpop.f32.mrb[0].mxu0
        %v1657 = vadd.f32 0.0, %v1656
        %v1658 = vpop.f32.mrb[0].mxu0
        %v1659 = vpop.f32.mrb[0].mxu0
        %v1660 = vadd.f32 0.0, %v1659
        %v1661 = vpop.f32.mrb[0].mxu0
        %1662 = vmatprep.mubr.bf16.mxu0 0
        %1663 = vmatmul.mubr.bf16.gmra.mrb[0].mxu0 %v1617
        %v1664 = vpop.f32.mrb[0].mxu0
        %v1665 = vadd.f32 0.0, %v1664
        %v1666 = vpop.f32.mrb[0].mxu0
        %v1667 = vpop.f32.mrb[0].mxu0
        %v1668 = vadd.f32 0.0, %v1667
        %v1669 = vpop.f32.mrb[0].mxu0
        %1670 = vmatprep.mubr.bf16.mxu0 0
        %1671 = vmatmul.mubr.bf16.gmra.mrb[0].mxu0 %v1620
        %v1672 = vpop.f32.mrb[0].mxu0
        %v1673 = vadd.f32 0.0, %v1672
        %v1674 = vpop.f32.mrb[0].mxu0
        %v1675 = vpop.f32.mrb[0].mxu0
        %v1676 = vadd.f32 0.0, %v1675
        %v1677 = vpop.f32.mrb[0].mxu0
        %1678 = vdwg.mxu0
        %v1679 = vpack.c.bf16 %v1660, %v1657
        %v1680 = vpack.c.bf16 %v1668, %v1665
        %v1681 = vpack.c.bf16 %v1676, %v1673
        %v1682 = vld [vmem:[%s8] sm:$0xf]
        %v1683 = vld [vmem:[%s8 + $0x4] sm:$0xf]
        %v1684 = vld [vmem:[%s8 + $0x8] sm:$0xf]
        %v1685 = vld [vmem:[%s8 + $0xc] sm:$0xf]
        %s1686 = scalar_lea.vmem %s8, 16
        %v1687 = vld [vmem:[%s1686] sm:$0xf]
        %v1688 = vld [vmem:[%s1686 + $0x4] sm:$0xf]
        %v1689 = vld [vmem:[%s1686 + $0x8] sm:$0xf]
        %v1690 = vld [vmem:[%s1686 + $0xc] sm:$0xf]
        %v1695 = vunpack.c.l.b16 %v1687
        %v1696 = vunpack.c.l.b16 %v1688
        %v1697 = vunpack.c.l.b16 %v1689
        %v1698 = vunpack.c.l.b16 %v1690
        %v1699 = vpack.c.b16 %v1696, %v1695
        %v1700 = vpack.c.b16 %v1698, %v1697
        %v1704 = vsel %vm836, %v1680, 0
        %1706 = vmatprep.subr.bf16.mxu0 0
        %1707 = vmatpush1.bf16.msra.mxu0 %v1699
        %1708 = vmatprep.subr.bf16.mxu0 0
        %1709 = vmatpush1.bf16.msra.mxu0 %v1700
        %1710 = vmatprep.subr.bf16.mxu0 0
        %1711 = vmatpush1.bf16.msra.mxu0 0
        %1712 = vmatprep.subr.bf16.mxu0 0
        %1713 = vmatpush1.bf16.msra.mxu0 0
        %1714 = vmatprep.subr.bf16.mxu0 0
        %1715 = vmatpush1.bf16.msra.mxu0 0
        %1716 = vmatprep.subr.bf16.mxu0 0
        %1717 = vmatpush1.bf16.msra.mxu0 0
        %1718 = vmatprep.subr.bf16.mxu0 0
        %1719 = vmatpush1.bf16.msra.mxu0 0
        %1720 = vmatprep.subr.bf16.mxu0 0
        %1721 = vmatpush1.bf16.msra.mxu0 0
        %1722 = vmatprep.subr.bf16.mxu0 0
        %1723 = vmatpush1.bf16.msra.mxu0 0
        %1724 = vmatprep.subr.bf16.mxu0 0
        %1725 = vmatpush1.bf16.msra.mxu0 0
        %1726 = vmatprep.subr.bf16.mxu0 0
        %1727 = vmatpush1.bf16.msra.mxu0 0
        %1728 = vmatprep.subr.bf16.mxu0 0
        %1729 = vmatpush1.bf16.msra.mxu0 0
        %1730 = vmatprep.subr.bf16.mxu0 0
        %1731 = vmatpush1.bf16.msra.mxu0 0
        %1732 = vmatprep.subr.bf16.mxu0 0
        %1733 = vmatpush1.bf16.msra.mxu0 0
        %1734 = vmatprep.subr.bf16.mxu0 0
        %1735 = vmatpush1.bf16.msra.mxu0 0
        %1736 = vmatprep.subr.bf16.mxu0 0
        %1737 = vmatpush1.bf16.msra.mxu0 0
        %1738 = vmatprep.mubr.bf16.mxu0 0
        %1739 = vmatmul.mubr.bf16.gmra.mrb[0].mxu0 %v1704
        %v1740 = vpop.f32.mrb[0].mxu0
        %v1741 = vadd.f32 0.0, %v1740
        %v1742 = vpop.f32.mrb[0].mxu0
        %v1743 = vpop.f32.mrb[0].mxu0
        %v1744 = vadd.f32 0.0, %v1743
        %v1745 = vpop.f32.mrb[0].mxu0
        %1746 = vdwg.mxu0
        %v1751 = vunpack.c.l.b16 %v1682
        %v1752 = vunpack.c.l.b16 %v1683
        %v1753 = vunpack.c.l.b16 %v1684
        %v1754 = vunpack.c.l.b16 %v1685
        %v1755 = vpack.c.b16 %v1752, %v1751
        %v1756 = vpack.c.b16 %v1754, %v1753
        %v1760 = vsel %vm836, %v1679, 0
        %1762 = vmatprep.subr.bf16.mxu0 0
        %1763 = vmatpush1.bf16.msra.mxu0 %v1755
        %1764 = vmatprep.subr.bf16.mxu0 0
        %1765 = vmatpush1.bf16.msra.mxu0 %v1756
        %1766 = vmatprep.subr.bf16.mxu0 0
        %1767 = vmatpush1.bf16.msra.mxu0 0
        %1768 = vmatprep.subr.bf16.mxu0 0
        %1769 = vmatpush1.bf16.msra.mxu0 0
        %1770 = vmatprep.subr.bf16.mxu0 0
        %1771 = vmatpush1.bf16.msra.mxu0 0
        %1772 = vmatprep.subr.bf16.mxu0 0
        %1773 = vmatpush1.bf16.msra.mxu0 0
        %1774 = vmatprep.subr.bf16.mxu0 0
        %1775 = vmatpush1.bf16.msra.mxu0 0
        %1776 = vmatprep.subr.bf16.mxu0 0
        %1777 = vmatpush1.bf16.msra.mxu0 0
        %1778 = vmatprep.subr.bf16.mxu0 0
        %1779 = vmatpush1.bf16.msra.mxu0 0
        %1780 = vmatprep.subr.bf16.mxu0 0
        %1781 = vmatpush1.bf16.msra.mxu0 0
        %1782 = vmatprep.subr.bf16.mxu0 0
        %1783 = vmatpush1.bf16.msra.mxu0 0
        %1784 = vmatprep.subr.bf16.mxu0 0
        %1785 = vmatpush1.bf16.msra.mxu0 0
        %1786 = vmatprep.subr.bf16.mxu0 0
        %1787 = vmatpush1.bf16.msra.mxu0 0
        %1788 = vmatprep.subr.bf16.mxu0 0
        %1789 = vmatpush1.bf16.msra.mxu0 0
        %1790 = vmatprep.subr.bf16.mxu0 0
        %1791 = vmatpush1.bf16.msra.mxu0 0
        %1792 = vmatprep.subr.bf16.mxu0 0
        %1793 = vmatpush1.bf16.msra.mxu0 0
        %1794 = vmatprep.mubr.bf16.mxu0 0
        %1795 = vmatmul.mubr.bf16.gmra.mrb[0].mxu0 %v1760
        %v1796 = vpop.f32.mrb[0].mxu0
        %v1797 = vadd.f32 %v1741, %v1796
        %v1798 = vpop.f32.mrb[0].mxu0
        %v1799 = vpop.f32.mrb[0].mxu0
        %v1800 = vadd.f32 %v1744, %v1799
        %v1801 = vpop.f32.mrb[0].mxu0
        %1802 = vdwg.mxu0
        %s1803 = scalar_lea.vmem %s8, 32
        %v1804 = vld [vmem:[%s1803] sm:$0xf]
        %v1805 = vld [vmem:[%s1803 + $0x4] sm:$0xf]
        %v1806 = vld [vmem:[%s1803 + $0x8] sm:$0xf]
        %v1807 = vld [vmem:[%s1803 + $0xc] sm:$0xf]
        %v1812 = vunpack.c.l.b16 %v1804
        %v1813 = vunpack.c.l.b16 %v1805
        %v1814 = vunpack.c.l.b16 %v1806
        %v1815 = vunpack.c.l.b16 %v1807
        %v1816 = vpack.c.b16 %v1813, %v1812
        %v1817 = vpack.c.b16 %v1815, %v1814
        %v1821 = vsel %vm836, %v1681, 0
        %1823 = vmatprep.subr.bf16.mxu0 0
        %1824 = vmatpush1.bf16.msra.mxu0 %v1816
        %1825 = vmatprep.subr.bf16.mxu0 0
        %1826 = vmatpush1.bf16.msra.mxu0 %v1817
        %1827 = vmatprep.subr.bf16.mxu0 0
        %1828 = vmatpush1.bf16.msra.mxu0 0
        %1829 = vmatprep.subr.bf16.mxu0 0
        %1830 = vmatpush1.bf16.msra.mxu0 0
        %1831 = vmatprep.subr.bf16.mxu0 0
        %1832 = vmatpush1.bf16.msra.mxu0 0
        %1833 = vmatprep.subr.bf16.mxu0 0
        %1834 = vmatpush1.bf16.msra.mxu0 0
        %1835 = vmatprep.subr.bf16.mxu0 0
        %1836 = vmatpush1.bf16.msra.mxu0 0
        %1837 = vmatprep.subr.bf16.mxu0 0
        %1838 = vmatpush1.bf16.msra.mxu0 0
        %1839 = vmatprep.subr.bf16.mxu0 0
        %1840 = vmatpush1.bf16.msra.mxu0 0
        %1841 = vmatprep.subr.bf16.mxu0 0
        %1842 = vmatpush1.bf16.msra.mxu0 0
        %1843 = vmatprep.subr.bf16.mxu0 0
        %1844 = vmatpush1.bf16.msra.mxu0 0
        %1845 = vmatprep.subr.bf16.mxu0 0
        %1846 = vmatpush1.bf16.msra.mxu0 0
        %1847 = vmatprep.subr.bf16.mxu0 0
        %1848 = vmatpush1.bf16.msra.mxu0 0
        %1849 = vmatprep.subr.bf16.mxu0 0
        %1850 = vmatpush1.bf16.msra.mxu0 0
        %1851 = vmatprep.subr.bf16.mxu0 0
        %1852 = vmatpush1.bf16.msra.mxu0 0
        %1853 = vmatprep.subr.bf16.mxu0 0
        %1854 = vmatpush1.bf16.msra.mxu0 0
        %1855 = vmatprep.mubr.bf16.mxu0 0
        %1856 = vmatmul.mubr.bf16.gmra.mrb[0].mxu0 %v1821
        %v1857 = vpop.f32.mrb[0].mxu0
        %v1858 = vadd.f32 0.0, %v1857
        %v1859 = vpop.f32.mrb[0].mxu0
        %v1860 = vpop.f32.mrb[0].mxu0
        %v1861 = vadd.f32 0.0, %v1860
        %v1862 = vpop.f32.mrb[0].mxu0
        %1863 = vdwg.mxu0
        %v1864 = vadd.f32 %v1797, %v1858
        %v1865 = vadd.f32 %v1800, %v1861
        %v1866 = vlaneseq
        %v1867 = vshrl.u32 %v1866, 7
        %v1868 = vsub.s32 1, %v1867
        %v1869 = vrot.slane %v387, %v1868
        %v1870 = vmul.f32 %v1864, %v1869
        %v1871 = vmul.f32 %v1865, %v1869
        %v1872 = vlaneseq
        %v1873 = vshrl.u32 %v1872, 7
        %v1874 = vsub.s32 2, %v1873
        %v1875 = vrot.slane %v387, %v1874
        %v1876 = vadd.f32 %v1870, %v1875
        %v1877 = vadd.f32 %v1871, %v1875
        %vm1878 = vcmp.ge.f32.partialorder %v1876, 0.0
        %vm1879 = vcmp.ge.f32.partialorder %v1877, 0.0
        %v1880 = vlaneseq
        %v1881 = vshrl.u32 %v1880, 7
        %v1882 = vsub.s32 3, %v1881
        %v1883 = vrot.slane %v387, %v1882
        %v1884 = vmul.f32 %v1883, %v1876
        %v1885 = vmul.f32 %v1883, %v1877
        %v1886 = vsel %vm1878, %v1876, %v1884
        %v1887 = vsel %vm1879, %v1877, %v1885
        %v1888 = vadd.f32 %v1886, %v1589
        %v1889 = vadd.f32 %v1887, %v1590
        %v1890 = vpack.c.bf16 %v1888, %v1888
        %v1891 = vld [vmem:[%s10] sm:$0xf]
        %v1892 = vld [vmem:[%s10 + $0x4] sm:$0xf]
        %v1893 = vld [vmem:[%s10 + $0x8] sm:$0xf]
        %v1894 = vld [vmem:[%s10 + $0xc] sm:$0xf]
        %s1895 = scalar_lea.vmem %s10, 16
        %v1896 = vld [vmem:[%s1895] sm:$0xf]
        %v1897 = vld [vmem:[%s1895 + $0x4] sm:$0xf]
        %v1898 = vld [vmem:[%s1895 + $0x8] sm:$0xf]
        %v1899 = vld [vmem:[%s1895 + $0xc] sm:$0xf]
        %v1901 = vrot.slane %v1890, 2
        %v1906 = vunpack.c.l.b16 %v1896
        %v1907 = vunpack.c.l.b16 %v1897
        %v1908 = vunpack.c.l.b16 %v1898
        %v1909 = vunpack.c.l.b16 %v1899
        %v1910 = vpack.c.b16 %v1907, %v1906
        %v1911 = vpack.c.b16 %v1909, %v1908
        %v1915 = vsel %vm836, %v1901, 0
        %1917 = vmatprep.subr.bf16.mxu0 0
        %1918 = vmatpush1.bf16.msra.mxu0 %v1910
        %1919 = vmatprep.subr.bf16.mxu0 0
        %1920 = vmatpush1.bf16.msra.mxu0 %v1911
        %1921 = vmatprep.subr.bf16.mxu0 0
        %1922 = vmatpush1.bf16.msra.mxu0 0
        %1923 = vmatprep.subr.bf16.mxu0 0
        %1924 = vmatpush1.bf16.msra.mxu0 0
        %1925 = vmatprep.subr.bf16.mxu0 0
        %1926 = vmatpush1.bf16.msra.mxu0 0
        %1927 = vmatprep.subr.bf16.mxu0 0
        %1928 = vmatpush1.bf16.msra.mxu0 0
        %1929 = vmatprep.subr.bf16.mxu0 0
        %1930 = vmatpush1.bf16.msra.mxu0 0
        %1931 = vmatprep.subr.bf16.mxu0 0
        %1932 = vmatpush1.bf16.msra.mxu0 0
        %1933 = vmatprep.subr.bf16.mxu0 0
        %1934 = vmatpush1.bf16.msra.mxu0 0
        %1935 = vmatprep.subr.bf16.mxu0 0
        %1936 = vmatpush1.bf16.msra.mxu0 0
        %1937 = vmatprep.subr.bf16.mxu0 0
        %1938 = vmatpush1.bf16.msra.mxu0 0
        %1939 = vmatprep.subr.bf16.mxu0 0
        %1940 = vmatpush1.bf16.msra.mxu0 0
        %1941 = vmatprep.subr.bf16.mxu0 0
        %1942 = vmatpush1.bf16.msra.mxu0 0
        %1943 = vmatprep.subr.bf16.mxu0 0
        %1944 = vmatpush1.bf16.msra.mxu0 0
        %1945 = vmatprep.subr.bf16.mxu0 0
        %1946 = vmatpush1.bf16.msra.mxu0 0
        %1947 = vmatprep.subr.bf16.mxu0 0
        %1948 = vmatpush1.bf16.msra.mxu0 0
        %1949 = vmatprep.mubr.bf16.mxu0 0
        %1950 = vmatmul.mubr.bf16.gmra.mrb[0].mxu0 %v1915
        %v1951 = vpop.f32.mrb[0].mxu0
        %v1952 = vadd.f32 0.0, %v1951
        %v1953 = vpop.f32.mrb[0].mxu0
        %v1954 = vpop.f32.mrb[0].mxu0
        %v1955 = vpop.f32.mrb[0].mxu0
        %1956 = vdwg.mxu0
        %v1961 = vunpack.c.l.b16 %v1891
        %v1962 = vunpack.c.l.b16 %v1892
        %v1963 = vunpack.c.l.b16 %v1893
        %v1964 = vunpack.c.l.b16 %v1894
        %v1965 = vpack.c.b16 %v1962, %v1961
        %v1966 = vpack.c.b16 %v1964, %v1963
        %v1970 = vsel %vm836, %v1890, 0
        %1972 = vmatprep.subr.bf16.mxu0 0
        %1973 = vmatpush1.bf16.msra.mxu0 %v1965
        %1974 = vmatprep.subr.bf16.mxu0 0
        %1975 = vmatpush1.bf16.msra.mxu0 %v1966
        %1976 = vmatprep.subr.bf16.mxu0 0
        %1977 = vmatpush1.bf16.msra.mxu0 0
        %1978 = vmatprep.subr.bf16.mxu0 0
        %1979 = vmatpush1.bf16.msra.mxu0 0
        %1980 = vmatprep.subr.bf16.mxu0 0
        %1981 = vmatpush1.bf16.msra.mxu0 0
        %1982 = vmatprep.subr.bf16.mxu0 0
        %1983 = vmatpush1.bf16.msra.mxu0 0
        %1984 = vmatprep.subr.bf16.mxu0 0
        %1985 = vmatpush1.bf16.msra.mxu0 0
        %1986 = vmatprep.subr.bf16.mxu0 0
        %1987 = vmatpush1.bf16.msra.mxu0 0
        %1988 = vmatprep.subr.bf16.mxu0 0
        %1989 = vmatpush1.bf16.msra.mxu0 0
        %1990 = vmatprep.subr.bf16.mxu0 0
        %1991 = vmatpush1.bf16.msra.mxu0 0
        %1992 = vmatprep.subr.bf16.mxu0 0
        %1993 = vmatpush1.bf16.msra.mxu0 0
        %1994 = vmatprep.subr.bf16.mxu0 0
        %1995 = vmatpush1.bf16.msra.mxu0 0
        %1996 = vmatprep.subr.bf16.mxu0 0
        %1997 = vmatpush1.bf16.msra.mxu0 0
        %1998 = vmatprep.subr.bf16.mxu0 0
        %1999 = vmatpush1.bf16.msra.mxu0 0
        %2000 = vmatprep.subr.bf16.mxu0 0
        %2001 = vmatpush1.bf16.msra.mxu0 0
        %2002 = vmatprep.subr.bf16.mxu0 0
        %2003 = vmatpush1.bf16.msra.mxu0 0
        %2004 = vmatprep.mubr.bf16.mxu0 0
        %2005 = vmatmul.mubr.bf16.gmra.mrb[0].mxu0 %v1970
        %v2006 = vpop.f32.mrb[0].mxu0
        %v2007 = vadd.f32 %v1952, %v2006
        %v2008 = vpop.f32.mrb[0].mxu0
        %v2009 = vpop.f32.mrb[0].mxu0
        %v2010 = vpop.f32.mrb[0].mxu0
        %2011 = vdwg.mxu0
        %v2012 = vpack.c.bf16 %v1889, %v1889
        %s2013 = scalar_lea.vmem %s10, 32
        %v2014 = vld [vmem:[%s2013] sm:$0xf]
        %v2015 = vld [vmem:[%s2013 + $0x4] sm:$0xf]
        %v2016 = vld [vmem:[%s2013 + $0x8] sm:$0xf]
        %v2017 = vld [vmem:[%s2013 + $0xc] sm:$0xf]
        %v2022 = vunpack.c.l.b16 %v2014
        %v2023 = vunpack.c.l.b16 %v2015
        %v2024 = vunpack.c.l.b16 %v2016
        %v2025 = vunpack.c.l.b16 %v2017
        %v2026 = vpack.c.b16 %v2023, %v2022
        %v2027 = vpack.c.b16 %v2025, %v2024
        %v2031 = vsel %vm836, %v2012, 0
        %2033 = vmatprep.subr.bf16.mxu0 0
        %2034 = vmatpush1.bf16.msra.mxu0 %v2026
        %2035 = vmatprep.subr.bf16.mxu0 0
        %2036 = vmatpush1.bf16.msra.mxu0 %v2027
        %2037 = vmatprep.subr.bf16.mxu0 0
        %2038 = vmatpush1.bf16.msra.mxu0 0
        %2039 = vmatprep.subr.bf16.mxu0 0
        %2040 = vmatpush1.bf16.msra.mxu0 0
        %2041 = vmatprep.subr.bf16.mxu0 0
        %2042 = vmatpush1.bf16.msra.mxu0 0
        %2043 = vmatprep.subr.bf16.mxu0 0
        %2044 = vmatpush1.bf16.msra.mxu0 0
        %2045 = vmatprep.subr.bf16.mxu0 0
        %2046 = vmatpush1.bf16.msra.mxu0 0
        %2047 = vmatprep.subr.bf16.mxu0 0
        %2048 = vmatpush1.bf16.msra.mxu0 0
        %2049 = vmatprep.subr.bf16.mxu0 0
        %2050 = vmatpush1.bf16.msra.mxu0 0
        %2051 = vmatprep.subr.bf16.mxu0 0
        %2052 = vmatpush1.bf16.msra.mxu0 0
        %2053 = vmatprep.subr.bf16.mxu0 0
        %2054 = vmatpush1.bf16.msra.mxu0 0
        %2055 = vmatprep.subr.bf16.mxu0 0
        %2056 = vmatpush1.bf16.msra.mxu0 0
        %2057 = vmatprep.subr.bf16.mxu0 0
        %2058 = vmatpush1.bf16.msra.mxu0 0
        %2059 = vmatprep.subr.bf16.mxu0 0
        %2060 = vmatpush1.bf16.msra.mxu0 0
        %2061 = vmatprep.subr.bf16.mxu0 0
        %2062 = vmatpush1.bf16.msra.mxu0 0
        %2063 = vmatprep.subr.bf16.mxu0 0
        %2064 = vmatpush1.bf16.msra.mxu0 0
        %2065 = vmatprep.mubr.bf16.mxu0 0
        %2066 = vmatmul.mubr.bf16.gmra.mrb[0].mxu0 %v2031
        %v2067 = vpop.f32.mrb[0].mxu0
        %v2068 = vadd.f32 0.0, %v2067
        %v2069 = vpop.f32.mrb[0].mxu0
        %v2070 = vpop.f32.mrb[0].mxu0
        %v2071 = vpop.f32.mrb[0].mxu0
        %2072 = vdwg.mxu0
        %v2073 = vadd.f32 %v2007, %v2068
        %s2074 = scalar_lea.vmem %s10, 48
        %v2075 = vld [vmem:[%s2074] sm:$0xf]
        %v2076 = vld [vmem:[%s2074 + $0x4] sm:$0xf]
        %v2077 = vld [vmem:[%s2074 + $0x8] sm:$0xf]
        %v2078 = vld [vmem:[%s2074 + $0xc] sm:$0xf]
        %v2080 = vrot.slane %v2012, 2
        %v2085 = vunpack.c.l.b16 %v2075
        %v2086 = vunpack.c.l.b16 %v2076
        %v2087 = vunpack.c.l.b16 %v2077
        %v2088 = vunpack.c.l.b16 %v2078
        %v2089 = vpack.c.b16 %v2086, %v2085
        %v2090 = vpack.c.b16 %v2088, %v2087
        %v2094 = vsel %vm836, %v2080, 0
        %2096 = vmatprep.subr.bf16.mxu0 0
        %2097 = vmatpush1.bf16.msra.mxu0 %v2089
        %2098 = vmatprep.subr.bf16.mxu0 0
        %2099 = vmatpush1.bf16.msra.mxu0 %v2090
        %2100 = vmatprep.subr.bf16.mxu0 0
        %2101 = vmatpush1.bf16.msra.mxu0 0
        %2102 = vmatprep.subr.bf16.mxu0 0
        %2103 = vmatpush1.bf16.msra.mxu0 0
        %2104 = vmatprep.subr.bf16.mxu0 0
        %2105 = vmatpush1.bf16.msra.mxu0 0
        %2106 = vmatprep.subr.bf16.mxu0 0
        %2107 = vmatpush1.bf16.msra.mxu0 0
        %2108 = vmatprep.subr.bf16.mxu0 0
        %2109 = vmatpush1.bf16.msra.mxu0 0
        %2110 = vmatprep.subr.bf16.mxu0 0
        %2111 = vmatpush1.bf16.msra.mxu0 0
        %2112 = vmatprep.subr.bf16.mxu0 0
        %2113 = vmatpush1.bf16.msra.mxu0 0
        %2114 = vmatprep.subr.bf16.mxu0 0
        %2115 = vmatpush1.bf16.msra.mxu0 0
        %2116 = vmatprep.subr.bf16.mxu0 0
        %2117 = vmatpush1.bf16.msra.mxu0 0
        %2118 = vmatprep.subr.bf16.mxu0 0
        %2119 = vmatpush1.bf16.msra.mxu0 0
        %2120 = vmatprep.subr.bf16.mxu0 0
        %2121 = vmatpush1.bf16.msra.mxu0 0
        %2122 = vmatprep.subr.bf16.mxu0 0
        %2123 = vmatpush1.bf16.msra.mxu0 0
        %2124 = vmatprep.subr.bf16.mxu0 0
        %2125 = vmatpush1.bf16.msra.mxu0 0
        %2126 = vmatprep.subr.bf16.mxu0 0
        %2127 = vmatpush1.bf16.msra.mxu0 0
        %2128 = vmatprep.mubr.bf16.mxu0 0
        %2129 = vmatmul.mubr.bf16.gmra.mrb[0].mxu0 %v2094
        %v2130 = vpop.f32.mrb[0].mxu0
        %v2131 = vadd.f32 0.0, %v2130
        %v2132 = vpop.f32.mrb[0].mxu0
        %v2133 = vpop.f32.mrb[0].mxu0
        %v2134 = vpop.f32.mrb[0].mxu0
        %2135 = vdwg.mxu0
        %v2136 = vadd.f32 %v2073, %v2131
        %v2137 = vlaneseq
        %v2138 = vshrl.u32 %v2137, 7
        %v2139 = vsub.s32 4, %v2138
        %v2140 = vrot.slane %v387, %v2139
        %v2141 = vmul.f32 %v2136, %v2140
        %v2142 = vlaneseq
        %v2143 = vshrl.u32 %v2142, 7
        %v2144 = vsub.s32 5, %v2143
        %v2145 = vrot.slane %v387, %v2144
        %v2146 = vadd.f32 %v2141, %v2145
        %vm2147 = vcmask 257024
        %2148 = vst.msk [vmem:[%s379] sm:$0xf] %vm2147, %v2146
        %s2149 = sand.u32 %s269, 1
        %s2150 = scalar_lea.sflag [#allocation3], %s2149
        %s2151 = sand.u32 %s269, 1
        %s2152 = smul.addr %s2151, 4
        %s2153 = scalar_lea.vmem [#allocation2], %s2152
        // Predicated region
        $region65: #{tpu_custom_call.1} parent=63 // pred_check
          %p2154 = pneg %p279
        $region66: #{tpu_custom_call.1} parent=63 // pred_check_branch
          %2156 = sbr.rel (%p2154) target = $region68
        $region67: #{tpu_custom_call.1} parent=63 // pred_region
          %s2158 = ssub.s32 64, 64
          %2159 = vsyncadd %s2150, %s2158
          %s2160 = smul.addr %s25, 64
          %s2161 = scalar_lea.hbm %s11, %s2160
          %s2163 = sshll.u32 %s2153, 4
          %s2164 = int_to_ptr.vmem [resolvable:$true] %s2163
          %2166 = dma.vmem_to_hbm [thread:$0]  %s2164, 64, %s2161, %s2150
        $region68: #{tpu_custom_call.1} parent=63 // pred_fallthru
          _
      $region64: #{tpu_custom_call.1} parent=5 // pred_fallthru
        _
      %p2167 = scmp.le.s32.totalorder 2, %s20
      // Predicated region
      $region69: #{tpu_custom_call.1} parent=5 // pred_check
        %p2168 = pneg %p2167
      $region70: #{tpu_custom_call.1} parent=5 // pred_check_branch
        %2170 = sbr.rel (%p2168) target = $region72
      $region71: #{tpu_custom_call.1} parent=5 // pred_region
        %s2171 = ssub.s32 %s20, 2
        // Predicated region
        $region73: #{tpu_custom_call.1} parent=71 // pred_check
          %p2172 = pneg %p285
        $region74: #{tpu_custom_call.1} parent=71 // pred_check_branch
          %2174 = sbr.rel (%p2172) target = $region76
        $region75: #{tpu_custom_call.1} parent=71 // pred_region
          %s2175 = sand.u32 %s270, 1
          %s2176 = scalar_lea.sflag [#allocation3], %s2175
          %s2177 = sand.u32 %s270, 1
          %s2178 = smul.addr %s2177, 4
          %s2179 = scalar_lea.vmem [#allocation2], %s2178
          %2180 = dma.done %s2176, 64
        $region76: #{tpu_custom_call.1} parent=71 // pred_fallthru
          _
      $region72: #{tpu_custom_call.1} parent=5 // pred_fallthru
        _
    $region6: #{tpu_custom_call.1} parent=1 // loop_footer
      %s24 = sadd.s32 1, %s20
    $region7: #{tpu_custom_call.1} parent=1 // loop_footer_branch
      %19 = sbr.rel target = $region3
    $region8: #{tpu_custom_call.1} parent=1 // loop_exit
      _
    %2181 = vsyncpa [#allocation3], 1
    %s2182 = scalar_lea.sflag [#allocation3], 1
    %2183 = vsyncpa %s2182, 1

</llo_original>
